<compile_context>
chip_gen: v5e
topology: v5e:2x2
jax: 0.10.0
libtpu: 0.0.40
codegen_flags: <defaults>
</compile_context>

<pallas_src>
import functools

import numpy as np
import jax
import jax.numpy as jnp
from jax import lax
from jax.experimental import pallas as pl
from jax.experimental.pallas import tpu as pltpu


def _round_up(x, m):
    return ((x + m - 1) // m) * m


# ----------------------------------------------------------------------------
# Pallas kernel: one fused bidirectional GRU layer.
# grid = (2 directions ["parallel"], time chunks ["arbitrary"])
# ----------------------------------------------------------------------------
def _bigru_layer_kernel(lens_ref, x_ref, w_ih_ref, w_hh_ref, bgi_ref, bhn_ref,
                        out_ref, h_ref, gi_ref, *, Tc, Hp):
    # lens_ref : [Bp, 1] int32   (padded batch rows have len 0)
    # x_ref    : [Tc, Bp, Din]   current time chunk (reversed chunk order for d=1)
    # w_ih_ref : [Din, 3*Hp]     gate blocks on Hp boundaries, zero-padded
    # w_hh_ref : [Hp, 3*Hp]
    # bgi_ref  : [1, 3*Hp]       b_ih (+ b_hh for r,z gates) folded
    # bhn_ref  : [1, Hp]         b_hn (stays inside the reset-gate product)
    # out_ref  : [Tc, Bp, Hp]    this direction's lane-half of [T, Bp, 2*Hp]
    # h_ref    : [Bp, Hp]        hidden state carried across time chunks
    # gi_ref   : [Tc, Bp, 3*Hp]  hoisted input projection for the chunk
    d = pl.program_id(0)                 # direction: 0 = fwd, 1 = bwd
    i = pl.program_id(1)                 # time-chunk counter
    nc = pl.num_programs(1)

    @pl.when(i == 0)
    def _():
        h_ref[...] = jnp.zeros_like(h_ref)

    Bp = h_ref.shape[0]
    Din = x_ref.shape[-1]

    # ---- hoisted input projection: one MXU GEMM for the whole chunk -------
    x_flat = x_ref[...].reshape(Tc * Bp, Din)
    gi = jnp.dot(x_flat, w_ih_ref[...], preferred_element_type=jnp.float32)
    gi = gi + bgi_ref[...]                               # folded biases, once
    gi_ref[...] = gi.reshape(Tc, Bp, 3 * Hp)

    # ---- loop-invariant values hoisted out of the step loop ----------------
    lens = lens_ref[...]                                 # [Bp, 1] int32
    bhn = jnp.broadcast_to(bhn_ref[...], (Bp, Hp))       # hoisted broadcast
    w_hh = w_hh_ref[...]
    time_block = i + d * (nc - 1 - 2 * i)                # chunk actually loaded
    t_base = time_block * Tc

    def step(j, carry):
        lj = j + d * (Tc - 1 - 2 * j)    # local row (reversed order for bwd)
        t = t_base + lj                  # global timestep
        h = h_ref[...]                   # [Bp, Hp]
        g = gi_ref[lj]                   # [Bp, 3*Hp]

        gh = jnp.dot(h, w_hh, preferred_element_type=jnp.float32)

        r = jax.nn.sigmoid(g[:, 0:Hp] + gh[:, 0:Hp])
        z = jax.nn.sigmoid(g[:, Hp:2 * Hp] + gh[:, Hp:2 * Hp])
        n = jnp.tanh(g[:, 2 * Hp:3 * Hp] + r * (gh[:, 2 * Hp:3 * Hp] + bhn))
        h_new = (1.0 - z) * n + z * h

        mask = t < lens                              # [Bp, 1] bool
        h_upd = jnp.where(mask, h_new, h)            # freeze past seq length
        h_ref[...] = h_upd
        out_ref[lj] = jnp.where(mask, h_upd, 0.0)    # zero-pad past seq length
        return carry

    lax.fori_loop(0, Tc, step, 0, unroll=True)


def _bigru_layer(x_tbd, lens2d, layer, *, Tc):
    """x_tbd: [Tpad, Bp, Din] time-major padded input -> [Tpad, Bp, 2*Hp]."""
    Tpad, Bp, Din = x_tbd.shape
    Hp = layer["w_hh"].shape[1]
    nc = Tpad // Tc

    def x_map(d, i):
        return (i + d * (nc - 1 - 2 * i), 0, 0)

    def out_map(d, i):
        return (i + d * (nc - 1 - 2 * i), 0, d)

    grid_spec = pltpu.PrefetchScalarGridSpec(
        num_scalar_prefetch=0,
        grid=(2, nc),
        in_specs=[
            pl.BlockSpec((Bp, 1), lambda d, i: (0, 0)),            # lens
            pl.BlockSpec((Tc, Bp, Din), x_map),                    # x chunk
            pl.BlockSpec((None, Din, 3 * Hp), lambda d, i: (d, 0, 0)),  # W_ih
            pl.BlockSpec((None, Hp, 3 * Hp), lambda d, i: (d, 0, 0)),   # W_hh
            pl.BlockSpec((None, 1, 3 * Hp), lambda d, i: (d, 0, 0)),    # b (r,z,n)
            pl.BlockSpec((None, 1, Hp), lambda d, i: (d, 0, 0)),        # b_hn
        ],
        out_specs=pl.BlockSpec((Tc, Bp, Hp), out_map),
        scratch_shapes=[
            pltpu.VMEM((Bp, Hp), jnp.float32),          # hidden state
            pltpu.VMEM((Tc, Bp, 3 * Hp), jnp.float32),  # hoisted input proj
        ],
    )

    return pl.pallas_call(
        functools.partial(_bigru_layer_kernel, Tc=Tc, Hp=Hp),
        out_shape=jax.ShapeDtypeStruct((Tpad, Bp, 2 * Hp), jnp.float32),
        grid_spec=grid_spec,
        compiler_params=pltpu.CompilerParams(
            dimension_semantics=("parallel", "arbitrary")),
    )(lens2d, x_tbd, layer["w_ih"], layer["w_hh"], layer["bgi"], layer["bhn"])


# ----------------------------------------------------------------------------
# Parameter init (same shapes / init range as torch.nn.GRU, bidirectional)
# ----------------------------------------------------------------------------
def init_gru_params(key, dim_in, dim_hid, num_rnn_layer):
    params = []
    bound = 1.0 / np.sqrt(dim_hid)
    for layer in range(num_rnn_layer):
        in_sz = dim_in if layer == 0 else 2 * dim_hid
        dirs = []
        for _direction in range(2):
            key, k1, k2, k3, k4 = jax.random.split(key, 5)
            dirs.append(dict(
                w_ih=jax.random.uniform(k1, (3 * dim_hid, in_sz), jnp.float32,
                                        -bound, bound),
                w_hh=jax.random.uniform(k2, (3 * dim_hid, dim_hid), jnp.float32,
                                        -bound, bound),
                b_ih=jax.random.uniform(k3, (3 * dim_hid,), jnp.float32,
                                        -bound, bound),
                b_hh=jax.random.uniform(k4, (3 * dim_hid,), jnp.float32,
                                        -bound, bound)))
        params.append(dirs)
    return params


# ----------------------------------------------------------------------------
# Pack PyTorch-layout params into the lane-aligned kernel layout.
#   gates land on Hp (=round_up(H,128)) lane boundaries, zero-padded,
#   fwd / bwd weights stacked on a leading direction axis,
#   r/z biases folded (b_ih + b_hh), b_hn kept separate.
# ----------------------------------------------------------------------------
def pack_params(raw_params, dim_in, dim_hid):
    H = dim_hid
    Hp = _round_up(H, 128)
    packed = []
    for li, layer in enumerate(raw_params):
        in_pad = dim_in if li == 0 else 2 * Hp
        w_ih_all = np.zeros((2, in_pad, 3 * Hp), np.float32)
        w_hh_all = np.zeros((2, Hp, 3 * Hp), np.float32)
        bgi_all = np.zeros((2, 1, 3 * Hp), np.float32)
        bhn_all = np.zeros((2, 1, Hp), np.float32)
        for d in range(2):
            p = layer[d]
            w_ih_t = np.asarray(p["w_ih"]).T            # [in_real, 3H]
            w_hh_t = np.asarray(p["w_hh"]).T            # [H, 3H]
            b_ih = np.asarray(p["b_ih"])                # [3H]
            b_hh = np.asarray(p["b_hh"])                # [3H]
            if li == 0:
                row_src = [(0, 0, dim_in)]              # (dst0, src0, length)
            else:                                       # input = [fwd H | bwd H]
                row_src = [(0, 0, H), (Hp, H, H)]
            for g in range(3):
                cd, cs = g * Hp, g * H
                for dst0, src0, ln in row_src:
                    w_ih_all[d, dst0:dst0 + ln, cd:cd + H] = \
                        w_ih_t[src0:src0 + ln, cs:cs + H]
                w_hh_all[d, 0:H, cd:cd + H] = w_hh_t[:, cs:cs + H]
                bgi_all[d, 0, cd:cd + H] = b_ih[cs:cs + H] + \
                    (b_hh[cs:cs + H] if g < 2 else 0.0)
            bhn_all[d, 0, 0:H] = b_hh[2 * H:3 * H]
        packed.append(dict(w_ih=jnp.asarray(w_ih_all),
                           w_hh=jnp.asarray(w_hh_all),
                           bgi=jnp.asarray(bgi_all),
                           bhn=jnp.asarray(bhn_all)))
    return packed


# ----------------------------------------------------------------------------
# Full module forward
# ----------------------------------------------------------------------------
def gru_birnn_word(x, seq_lens, packed_params, dim_hid, *, time_chunk=8):
    """x: [B, T, dim_in] float32, seq_lens: numpy int array [B]."""
    B, T, Din = x.shape
    H = dim_hid
    Hp = packed_params[0]["w_hh"].shape[1]
    seq_lens = np.asarray(seq_lens)
    t_max = int(seq_lens.max())

    Bp = _round_up(B, 8)
    Tc = time_chunk
    Tpad = _round_up(t_max, Tc)

    lens = np.zeros((Bp, 1), np.int32)
    lens[:B, 0] = seq_lens
    lens2d = jnp.asarray(lens)

    # trim to t_max, pad batch/time, go time-major once at entry
    xp = jnp.zeros((Tpad, Bp, Din), jnp.float32)
    xp = xp.at[:t_max, :B, :].set(jnp.transpose(x[:, :t_max, :], (1, 0, 2)))

    inp = xp
    for layer in packed_params:
        inp = _bigru_layer(inp, lens2d, layer, Tc=Tc)   # [Tpad, Bp, 2*Hp]

    # pick the real lanes of each direction, drop batch/time padding
    out = jnp.concatenate([inp[:t_max, :B, 0:H],
                           inp[:t_max, :B, Hp:Hp + H]], axis=-1)
    # pad_packed_sequence returns time dim == max(seq_lens); the PyTorch
    # sort / inverse-sort around pack/pad is the identity here.
    return jnp.transpose(out, (1, 0, 2))                # [B, t_max, 2H]


# ----------------------------------------------------------------------------
# Pure-JAX reference (unpadded math, python time loop) for correctness check
# ----------------------------------------------------------------------------
def _ref_gru_dir(x_tbd, lens2d, w_ih, w_hh, b_ih, b_hh, reverse, H):
    T, B, _ = x_tbd.shape
    h = jnp.zeros((B, H), jnp.float32)
    outs = [None] * T
    trange = range(T - 1, -1, -1) if reverse else range(T)
    for t in trange:
        gi = x_tbd[t] @ w_ih + b_ih
        gh = h @ w_hh + b_hh
        r = jax.nn.sigmoid(gi[:, :H] + gh[:, :H])
        z = jax.nn.sigmoid(gi[:, H:2 * H] + gh[:, H:2 * H])
        n = jnp.tanh(gi[:, 2 * H:] + r * gh[:, 2 * H:])
        h_new = (1.0 - z) * n + z * h
        mask = t < lens2d
        h = jnp.where(mask, h_new, h)
        outs[t] = jnp.where(mask, h, 0.0)
    return jnp.stack(outs, axis=0)


def _ref_model(x, seq_lens, raw_params, dim_hid):
    H = dim_hid
    B, T, _ = x.shape
    seq_lens = np.asarray(seq_lens)
    t_max = int(seq_lens.max())
    lens2d = jnp.asarray(seq_lens.reshape(B, 1).astype(np.int32))
    inp = jnp.transpose(x[:, :t_max], (1, 0, 2))
    for layer in raw_params:
        outs = []
        for d, reverse in ((0, False), (1, True)):
            p = layer[d]
            outs.append(_ref_gru_dir(
                inp, lens2d,
                jnp.asarray(p["w_ih"]).T, jnp.asarray(p["w_hh"]).T,
                jnp.asarray(p["b_ih"]).reshape(1, -1),
                jnp.asarray(p["b_hh"]).reshape(1, -1),
                reverse, H))
        inp = jnp.concatenate(outs, axis=-1)
    return jnp.transpose(inp, (1, 0, 2))


if __name__ == "__main__":
    B, T, dim_in, dim_hid, num_rnn_layer = 4, 8, 16, 32, 2

    key = jax.random.PRNGKey(0)
    kx, kp = jax.random.split(key)
    x = jax.random.normal(kx, (B, T, dim_in), dtype=jnp.float32)
    seq_lens = np.array([8, 5, 8, 3], dtype=np.int32)   # variable lengths

    raw_params = init_gru_params(kp, dim_in, dim_hid, num_rnn_layer)
    packed_params = pack_params(raw_params, dim_in, dim_hid)

    out = gru_birnn_word(x, seq_lens, packed_params, dim_hid)
    out = jax.block_until_ready(out)
    assert out.shape == (B, int(seq_lens.max()), 2 * dim_hid)

    ref = jax.block_until_ready(_ref_model(x, seq_lens, raw_params, dim_hid))
    np.testing.assert_allclose(np.asarray(out), np.asarray(ref),
                               rtol=2e-5, atol=2e-5)

    print("KERNEL_OK")
</pallas_src>

<mosaic_0001>
module attributes {stable_mosaic.version = 11 : i64} {
  func.func @_bigru_layer_kernel(%arg0: i32, %arg1: i32, %arg2: memref<8x1xi32, #tpu.memory_space<vmem>>, %arg3: memref<8x8x16xf32, #tpu.memory_space<vmem>>, %arg4: memref<1x16x384xf32, #tpu.memory_space<vmem>>, %arg5: memref<1x128x384xf32, #tpu.memory_space<vmem>>, %arg6: memref<1x1x384xf32, #tpu.memory_space<vmem>>, %arg7: memref<1x1x128xf32, #tpu.memory_space<vmem>>, %arg8: memref<8x8x128xf32, #tpu.memory_space<vmem>>, %arg9: memref<8x128xf32, #tpu.memory_space<vmem>>, %arg10: memref<8x8x384xf32, #tpu.memory_space<vmem>>) attributes {dimension_semantics = [#tpu.dimension_semantics<parallel>, #tpu.dimension_semantics<arbitrary>], iteration_bounds = array<i64: 2, 1>, scalar_prefetch = 0 : i64, scratch_operands = 2 : i64, tpu.core_type = #tpu.core_type<tc>, window_params = [{pipeline_mode = #tpu.pipeline_mode<synchronous>, transform_indices = @transform_0, window_bounds = array<i64: 8, 1>}, {transform_indices = @transform_1, window_bounds = array<i64: 8, 8, 16>}, {transform_indices = @transform_2, window_bounds = array<i64: 1, 16, 384>}, {transform_indices = @transform_3, window_bounds = array<i64: 1, 128, 384>}, {transform_indices = @transform_4, window_bounds = array<i64: 1, 1, 384>}, {transform_indices = @transform_5, window_bounds = array<i64: 1, 1, 128>}, {transform_indices = @transform_6, window_bounds = array<i64: 8, 8, 128>}]} {
    %c0_i32 = arith.constant 0 : i32
    %0 = arith.cmpi eq, %arg1, %c0_i32 : i32
    %1 = arith.extui %0 : i1 to i32
    %c0_i32_0 = arith.constant 0 : i32
    %2 = arith.cmpi ne, %1, %c0_i32_0 : i32
    scf.if %2 {
      %cst_144 = arith.constant 0.000000e+00 : f32
      %434 = vector.broadcast %cst_144 : f32 to vector<8x128xf32>
      %c0_145 = arith.constant 0 : index
      %c0_146 = arith.constant 0 : index
      %435 = vector.load %arg9[%c0_145, %c0_146] : memref<8x128xf32, #tpu.memory_space<vmem>>, vector<8x128xf32>
      tpu.vector_store %arg9[%c0_145, %c0_146], %434 {strides = array<i32>} : memref<8x128xf32, #tpu.memory_space<vmem>>, vector<8x128xf32>,
    } else {
    }
    %c0 = arith.constant 0 : index
    %c0_1 = arith.constant 0 : index
    %c0_2 = arith.constant 0 : index
    %3 = vector.load %arg3[%c0, %c0_1, %c0_2] : memref<8x8x16xf32, #tpu.memory_space<vmem>>, vector<8x8x16xf32>
    %4 = vector.shape_cast %3 : vector<8x8x16xf32> to vector<64x16xf32>
    %c0_3 = arith.constant 0 : index
    %c0_4 = arith.constant 0 : index
    %c0_5 = arith.constant 0 : index
    %5 = vector.load %arg4[%c0_3, %c0_4, %c0_5] : memref<1x16x384xf32, #tpu.memory_space<vmem>>, vector<1x16x384xf32>
    %6 = vector.shape_cast %5 : vector<1x16x384xf32> to vector<16x384xf32>
    %cst = arith.constant dense<0.000000e+00> : vector<64x384xf32>
    %7 = tpu.matmul %4, %6, %cst {dimension_numbers = #tpu.dot_dimension_numbers<[1], [0], [0], [1], [0, 0, 1, 1], [], []>} : vector<64x16xf32>, vector<16x384xf32>, vector<64x384xf32> -> vector<64x384xf32>
    %c0_6 = arith.constant 0 : index
    %c0_7 = arith.constant 0 : index
    %c0_8 = arith.constant 0 : index
    %8 = vector.load %arg6[%c0_6, %c0_7, %c0_8] : memref<1x1x384xf32, #tpu.memory_space<vmem>>, vector<1x1x384xf32>
    %9 = vector.shape_cast %8 : vector<1x1x384xf32> to vector<1x384xf32>
    %10 = vector.broadcast %9 : vector<1x384xf32> to vector<64x384xf32>
    %11 = arith.addf %7, %10 : vector<64x384xf32>
    %12 = vector.shape_cast %11 : vector<64x384xf32> to vector<8x8x384xf32>
    %c0_9 = arith.constant 0 : index
    %c0_10 = arith.constant 0 : index
    %c0_11 = arith.constant 0 : index
    %13 = vector.load %arg10[%c0_9, %c0_10, %c0_11] : memref<8x8x384xf32, #tpu.memory_space<vmem>>, vector<8x8x384xf32>
    tpu.vector_store %arg10[%c0_9, %c0_10, %c0_11], %12 {strides = array<i32>} : memref<8x8x384xf32, #tpu.memory_space<vmem>>, vector<8x8x384xf32>,
    %c0_12 = arith.constant 0 : index
    %c0_13 = arith.constant 0 : index
    %14 = vector.load %arg2[%c0_12, %c0_13] : memref<8x1xi32, #tpu.memory_space<vmem>>, vector<8x1xi32>
    %c0_14 = arith.constant 0 : index
    %c0_15 = arith.constant 0 : index
    %c0_16 = arith.constant 0 : index
    %15 = vector.load %arg7[%c0_14, %c0_15, %c0_16] : memref<1x1x128xf32, #tpu.memory_space<vmem>>, vector<1x1x128xf32>
    %16 = vector.shape_cast %15 : vector<1x1x128xf32> to vector<1x128xf32>
    %17 = vector.shape_cast %16 : vector<1x128xf32> to vector<1x128xf32>
    %18 = vector.broadcast %17 : vector<1x128xf32> to vector<8x128xf32>
    %c0_17 = arith.constant 0 : index
    %c0_18 = arith.constant 0 : index
    %c0_19 = arith.constant 0 : index
    %19 = vector.load %arg5[%c0_17, %c0_18, %c0_19] : memref<1x128x384xf32, #tpu.memory_space<vmem>>, vector<1x128x384xf32>
    %20 = vector.shape_cast %19 : vector<1x128x384xf32> to vector<128x384xf32>
    %c2_i32 = arith.constant 2 : i32
    %21 = arith.muli %c2_i32, %arg1 : i32
    %c0_i32_20 = arith.constant 0 : i32
    %22 = arith.subi %c0_i32_20, %21 : i32
    %23 = arith.muli %arg0, %22 : i32
    %24 = arith.addi %arg1, %23 : i32
    %c8_i32 = arith.constant 8 : i32
    %25 = arith.muli %24, %c8_i32 : i32
    %c0_i32_21 = arith.constant 0 : i32
    %c2_i32_22 = arith.constant 2 : i32
    %26 = arith.muli %c2_i32_22, %c0_i32_21 : i32
    %c7_i32 = arith.constant 7 : i32
    %27 = arith.subi %c7_i32, %26 : i32
    %28 = arith.muli %arg0, %27 : i32
    %29 = arith.addi %c0_i32_21, %28 : i32
    %30 = arith.addi %25, %29 : i32
    %c0_23 = arith.constant 0 : index
    %c0_24 = arith.constant 0 : index
    %31 = vector.load %arg9[%c0_23, %c0_24] : memref<8x128xf32, #tpu.memory_space<vmem>>, vector<8x128xf32>
    %32 = arith.index_cast %29 : i32 to index
    %c0_25 = arith.constant 0 : index
    %c0_26 = arith.constant 0 : index
    %33 = vector.load %arg10[%32, %c0_25, %c0_26] : memref<8x8x384xf32, #tpu.memory_space<vmem>>, vector<1x8x384xf32>
    %34 = vector.shape_cast %33 : vector<1x8x384xf32> to vector<8x384xf32>
    %cst_27 = arith.constant dense<0.000000e+00> : vector<8x384xf32>
    %35 = tpu.matmul %31, %20, %cst_27 {dimension_numbers = #tpu.dot_dimension_numbers<[1], [0], [0], [1], [0, 0, 1, 1], [], []>} : vector<8x128xf32>, vector<128x384xf32>, vector<8x384xf32> -> vector<8x384xf32>
    %36 = vector.extract_strided_slice %34 {offsets = [0, 0], sizes = [8, 128], strides = [1, 1]} : vector<8x384xf32> to vector<8x128xf32>
    %37 = vector.extract_strided_slice %35 {offsets = [0, 0], sizes = [8, 128], strides = [1, 1]} : vector<8x384xf32> to vector<8x128xf32>
    %38 = arith.addf %36, %37 : vector<8x128xf32>
    %39 = arith.negf %38 : vector<8x128xf32>
    %40 = math.exp %39 : vector<8x128xf32>
    %cst_28 = arith.constant 1.000000e+00 : f32
    %41 = vector.broadcast %cst_28 : f32 to vector<8x128xf32>
    %42 = arith.addf %41, %40 : vector<8x128xf32>
    %43 = arith.divf %41, %42 : vector<8x128xf32>
    %44 = vector.extract_strided_slice %34 {offsets = [0, 128], sizes = [8, 128], strides = [1, 1]} : vector<8x384xf32> to vector<8x128xf32>
    %45 = vector.extract_strided_slice %35 {offsets = [0, 128], sizes = [8, 128], strides = [1, 1]} : vector<8x384xf32> to vector<8x128xf32>
    %46 = arith.addf %44, %45 : vector<8x128xf32>
    %47 = arith.negf %46 : vector<8x128xf32>
    %48 = math.exp %47 : vector<8x128xf32>
    %cst_29 = arith.constant 1.000000e+00 : f32
    %49 = vector.broadcast %cst_29 : f32 to vector<8x128xf32>
    %50 = arith.addf %49, %48 : vector<8x128xf32>
    %51 = arith.divf %49, %50 : vector<8x128xf32>
    %52 = vector.extract_strided_slice %34 {offsets = [0, 256], sizes = [8, 128], strides = [1, 1]} : vector<8x384xf32> to vector<8x128xf32>
    %53 = vector.extract_strided_slice %35 {offsets = [0, 256], sizes = [8, 128], strides = [1, 1]} : vector<8x384xf32> to vector<8x128xf32>
    %54 = arith.addf %53, %18 : vector<8x128xf32>
    %55 = arith.mulf %43, %54 : vector<8x128xf32>
    %56 = arith.addf %52, %55 : vector<8x128xf32>
    %57 = math.tanh %56 : vector<8x128xf32>
    %cst_30 = arith.constant 1.000000e+00 : f32
    %58 = vector.broadcast %cst_30 : f32 to vector<8x128xf32>
    %59 = arith.subf %58, %51 : vector<8x128xf32>
    %60 = arith.mulf %59, %57 : vector<8x128xf32>
    %61 = arith.mulf %51, %31 : vector<8x128xf32>
    %62 = arith.addf %60, %61 : vector<8x128xf32>
    %63 = vector.broadcast %30 : i32 to vector<8x1xi32>
    %64 = arith.cmpi slt, %63, %14 : vector<8x1xi32>
    %65 = vector.shape_cast %64 : vector<8x1xi1> to vector<8x1xi1>
    %66 = vector.broadcast %65 : vector<8x1xi1> to vector<8x128xi1>
    %67 = arith.select %66, %62, %31 : vector<8x128xi1>, vector<8x128xf32>
    %c0_31 = arith.constant 0 : index
    %c0_32 = arith.constant 0 : index
    %68 = vector.load %arg9[%c0_31, %c0_32] : memref<8x128xf32, #tpu.memory_space<vmem>>, vector<8x128xf32>
    tpu.vector_store %arg9[%c0_31, %c0_32], %67 {strides = array<i32>} : memref<8x128xf32, #tpu.memory_space<vmem>>, vector<8x128xf32>,
    %cst_33 = arith.constant 0.000000e+00 : f32
    %69 = vector.shape_cast %64 : vector<8x1xi1> to vector<8x1xi1>
    %70 = vector.broadcast %69 : vector<8x1xi1> to vector<8x128xi1>
    %71 = vector.broadcast %cst_33 : f32 to vector<8x128xf32>
    %72 = arith.select %70, %67, %71 : vector<8x128xi1>, vector<8x128xf32>
    %73 = arith.index_cast %29 : i32 to index
    %c0_34 = arith.constant 0 : index
    %c0_35 = arith.constant 0 : index
    %74 = vector.load %arg8[%73, %c0_34, %c0_35] : memref<8x8x128xf32, #tpu.memory_space<vmem>>, vector<1x8x128xf32>
    %75 = vector.shape_cast %74 : vector<1x8x128xf32> to vector<8x128xf32>
    %76 = vector.shape_cast %72 : vector<8x128xf32> to vector<1x8x128xf32>
    tpu.vector_store %arg8[%73, %c0_34, %c0_35], %76 {strides = array<i32>} : memref<8x8x128xf32, #tpu.memory_space<vmem>>, vector<1x8x128xf32>,
    %c1_i32 = arith.constant 1 : i32
    %c2_i32_36 = arith.constant 2 : i32
    %77 = arith.muli %c2_i32_36, %c1_i32 : i32
    %c7_i32_37 = arith.constant 7 : i32
    %78 = arith.subi %c7_i32_37, %77 : i32
    %79 = arith.muli %arg0, %78 : i32
    %80 = arith.addi %c1_i32, %79 : i32
    %81 = arith.addi %25, %80 : i32
    %c0_38 = arith.constant 0 : index
    %c0_39 = arith.constant 0 : index
    %82 = vector.load %arg9[%c0_38, %c0_39] : memref<8x128xf32, #tpu.memory_space<vmem>>, vector<8x128xf32>
    %83 = arith.index_cast %80 : i32 to index
    %c0_40 = arith.constant 0 : index
    %c0_41 = arith.constant 0 : index
    %84 = vector.load %arg10[%83, %c0_40, %c0_41] : memref<8x8x384xf32, #tpu.memory_space<vmem>>, vector<1x8x384xf32>
    %85 = vector.shape_cast %84 : vector<1x8x384xf32> to vector<8x384xf32>
    %cst_42 = arith.constant dense<0.000000e+00> : vector<8x384xf32>
    %86 = tpu.matmul %82, %20, %cst_42 {dimension_numbers = #tpu.dot_dimension_numbers<[1], [0], [0], [1], [0, 0, 1, 1], [], []>} : vector<8x128xf32>, vector<128x384xf32>, vector<8x384xf32> -> vector<8x384xf32>
    %87 = vector.extract_strided_slice %85 {offsets = [0, 0], sizes = [8, 128], strides = [1, 1]} : vector<8x384xf32> to vector<8x128xf32>
    %88 = vector.extract_strided_slice %86 {offsets = [0, 0], sizes = [8, 128], strides = [1, 1]} : vector<8x384xf32> to vector<8x128xf32>
    %89 = arith.addf %87, %88 : vector<8x128xf32>
    %90 = arith.negf %89 : vector<8x128xf32>
    %91 = math.exp %90 : vector<8x128xf32>
    %cst_43 = arith.constant 1.000000e+00 : f32
    %92 = vector.broadcast %cst_43 : f32 to vector<8x128xf32>
    %93 = arith.addf %92, %91 : vector<8x128xf32>
    %94 = arith.divf %92, %93 : vector<8x128xf32>
    %95 = vector.extract_strided_slice %85 {offsets = [0, 128], sizes = [8, 128], strides = [1, 1]} : vector<8x384xf32> to vector<8x128xf32>
    %96 = vector.extract_strided_slice %86 {offsets = [0, 128], sizes = [8, 128], strides = [1, 1]} : vector<8x384xf32> to vector<8x128xf32>
    %97 = arith.addf %95, %96 : vector<8x128xf32>
    %98 = arith.negf %97 : vector<8x128xf32>
    %99 = math.exp %98 : vector<8x128xf32>
    %cst_44 = arith.constant 1.000000e+00 : f32
    %100 = vector.broadcast %cst_44 : f32 to vector<8x128xf32>
    %101 = arith.addf %100, %99 : vector<8x128xf32>
    %102 = arith.divf %100, %101 : vector<8x128xf32>
    %103 = vector.extract_strided_slice %85 {offsets = [0, 256], sizes = [8, 128], strides = [1, 1]} : vector<8x384xf32> to vector<8x128xf32>
    %104 = vector.extract_strided_slice %86 {offsets = [0, 256], sizes = [8, 128], strides = [1, 1]} : vector<8x384xf32> to vector<8x128xf32>
    %105 = arith.addf %104, %18 : vector<8x128xf32>
    %106 = arith.mulf %94, %105 : vector<8x128xf32>
    %107 = arith.addf %103, %106 : vector<8x128xf32>
    %108 = math.tanh %107 : vector<8x128xf32>
    %cst_45 = arith.constant 1.000000e+00 : f32
    %109 = vector.broadcast %cst_45 : f32 to vector<8x128xf32>
    %110 = arith.subf %109, %102 : vector<8x128xf32>
    %111 = arith.mulf %110, %108 : vector<8x128xf32>
    %112 = arith.mulf %102, %82 : vector<8x128xf32>
    %113 = arith.addf %111, %112 : vector<8x128xf32>
    %114 = vector.broadcast %81 : i32 to vector<8x1xi32>
    %115 = arith.cmpi slt, %114, %14 : vector<8x1xi32>
    %116 = vector.shape_cast %115 : vector<8x1xi1> to vector<8x1xi1>
    %117 = vector.broadcast %116 : vector<8x1xi1> to vector<8x128xi1>
    %118 = arith.select %117, %113, %82 : vector<8x128xi1>, vector<8x128xf32>
    %c0_46 = arith.constant 0 : index
    %c0_47 = arith.constant 0 : index
    %119 = vector.load %arg9[%c0_46, %c0_47] : memref<8x128xf32, #tpu.memory_space<vmem>>, vector<8x128xf32>
    tpu.vector_store %arg9[%c0_46, %c0_47], %118 {strides = array<i32>} : memref<8x128xf32, #tpu.memory_space<vmem>>, vector<8x128xf32>,
    %cst_48 = arith.constant 0.000000e+00 : f32
    %120 = vector.shape_cast %115 : vector<8x1xi1> to vector<8x1xi1>
    %121 = vector.broadcast %120 : vector<8x1xi1> to vector<8x128xi1>
    %122 = vector.broadcast %cst_48 : f32 to vector<8x128xf32>
    %123 = arith.select %121, %118, %122 : vector<8x128xi1>, vector<8x128xf32>
    %124 = arith.index_cast %80 : i32 to index
    %c0_49 = arith.constant 0 : index
    %c0_50 = arith.constant 0 : index
    %125 = vector.load %arg8[%124, %c0_49, %c0_50] : memref<8x8x128xf32, #tpu.memory_space<vmem>>, vector<1x8x128xf32>
    %126 = vector.shape_cast %125 : vector<1x8x128xf32> to vector<8x128xf32>
    %127 = vector.shape_cast %123 : vector<8x128xf32> to vector<1x8x128xf32>
    tpu.vector_store %arg8[%124, %c0_49, %c0_50], %127 {strides = array<i32>} : memref<8x8x128xf32, #tpu.memory_space<vmem>>, vector<1x8x128xf32>,
    %c2_i32_51 = arith.constant 2 : i32
    %c2_i32_52 = arith.constant 2 : i32
    %128 = arith.muli %c2_i32_52, %c2_i32_51 : i32
    %c7_i32_53 = arith.constant 7 : i32
    %129 = arith.subi %c7_i32_53, %128 : i32
    %130 = arith.muli %arg0, %129 : i32
    %131 = arith.addi %c2_i32_51, %130 : i32
    %132 = arith.addi %25, %131 : i32
    %c0_54 = arith.constant 0 : index
    %c0_55 = arith.constant 0 : index
    %133 = vector.load %arg9[%c0_54, %c0_55] : memref<8x128xf32, #tpu.memory_space<vmem>>, vector<8x128xf32>
    %134 = arith.index_cast %131 : i32 to index
    %c0_56 = arith.constant 0 : index
    %c0_57 = arith.constant 0 : index
    %135 = vector.load %arg10[%134, %c0_56, %c0_57] : memref<8x8x384xf32, #tpu.memory_space<vmem>>, vector<1x8x384xf32>
    %136 = vector.shape_cast %135 : vector<1x8x384xf32> to vector<8x384xf32>
    %cst_58 = arith.constant dense<0.000000e+00> : vector<8x384xf32>
    %137 = tpu.matmul %133, %20, %cst_58 {dimension_numbers = #tpu.dot_dimension_numbers<[1], [0], [0], [1], [0, 0, 1, 1], [], []>} : vector<8x128xf32>, vector<128x384xf32>, vector<8x384xf32> -> vector<8x384xf32>
    %138 = vector.extract_strided_slice %136 {offsets = [0, 0], sizes = [8, 128], strides = [1, 1]} : vector<8x384xf32> to vector<8x128xf32>
    %139 = vector.extract_strided_slice %137 {offsets = [0, 0], sizes = [8, 128], strides = [1, 1]} : vector<8x384xf32> to vector<8x128xf32>
    %140 = arith.addf %138, %139 : vector<8x128xf32>
    %141 = arith.negf %140 : vector<8x128xf32>
    %142 = math.exp %141 : vector<8x128xf32>
    %cst_59 = arith.constant 1.000000e+00 : f32
    %143 = vector.broadcast %cst_59 : f32 to vector<8x128xf32>
    %144 = arith.addf %143, %142 : vector<8x128xf32>
    %145 = arith.divf %143, %144 : vector<8x128xf32>
    %146 = vector.extract_strided_slice %136 {offsets = [0, 128], sizes = [8, 128], strides = [1, 1]} : vector<8x384xf32> to vector<8x128xf32>
    %147 = vector.extract_strided_slice %137 {offsets = [0, 128], sizes = [8, 128], strides = [1, 1]} : vector<8x384xf32> to vector<8x128xf32>
    %148 = arith.addf %146, %147 : vector<8x128xf32>
    %149 = arith.negf %148 : vector<8x128xf32>
    %150 = math.exp %149 : vector<8x128xf32>
    %cst_60 = arith.constant 1.000000e+00 : f32
    %151 = vector.broadcast %cst_60 : f32 to vector<8x128xf32>
    %152 = arith.addf %151, %150 : vector<8x128xf32>
    %153 = arith.divf %151, %152 : vector<8x128xf32>
    %154 = vector.extract_strided_slice %136 {offsets = [0, 256], sizes = [8, 128], strides = [1, 1]} : vector<8x384xf32> to vector<8x128xf32>
    %155 = vector.extract_strided_slice %137 {offsets = [0, 256], sizes = [8, 128], strides = [1, 1]} : vector<8x384xf32> to vector<8x128xf32>
    %156 = arith.addf %155, %18 : vector<8x128xf32>
    %157 = arith.mulf %145, %156 : vector<8x128xf32>
    %158 = arith.addf %154, %157 : vector<8x128xf32>
    %159 = math.tanh %158 : vector<8x128xf32>
    %cst_61 = arith.constant 1.000000e+00 : f32
    %160 = vector.broadcast %cst_61 : f32 to vector<8x128xf32>
    %161 = arith.subf %160, %153 : vector<8x128xf32>
    %162 = arith.mulf %161, %159 : vector<8x128xf32>
    %163 = arith.mulf %153, %133 : vector<8x128xf32>
    %164 = arith.addf %162, %163 : vector<8x128xf32>
    %165 = vector.broadcast %132 : i32 to vector<8x1xi32>
    %166 = arith.cmpi slt, %165, %14 : vector<8x1xi32>
    %167 = vector.shape_cast %166 : vector<8x1xi1> to vector<8x1xi1>
    %168 = vector.broadcast %167 : vector<8x1xi1> to vector<8x128xi1>
    %169 = arith.select %168, %164, %133 : vector<8x128xi1>, vector<8x128xf32>
    %c0_62 = arith.constant 0 : index
    %c0_63 = arith.constant 0 : index
    %170 = vector.load %arg9[%c0_62, %c0_63] : memref<8x128xf32, #tpu.memory_space<vmem>>, vector<8x128xf32>
    tpu.vector_store %arg9[%c0_62, %c0_63], %169 {strides = array<i32>} : memref<8x128xf32, #tpu.memory_space<vmem>>, vector<8x128xf32>,
    %cst_64 = arith.constant 0.000000e+00 : f32
    %171 = vector.shape_cast %166 : vector<8x1xi1> to vector<8x1xi1>
    %172 = vector.broadcast %171 : vector<8x1xi1> to vector<8x128xi1>
    %173 = vector.broadcast %cst_64 : f32 to vector<8x128xf32>
    %174 = arith.select %172, %169, %173 : vector<8x128xi1>, vector<8x128xf32>
    %175 = arith.index_cast %131 : i32 to index
    %c0_65 = arith.constant 0 : index
    %c0_66 = arith.constant 0 : index
    %176 = vector.load %arg8[%175, %c0_65, %c0_66] : memref<8x8x128xf32, #tpu.memory_space<vmem>>, vector<1x8x128xf32>
    %177 = vector.shape_cast %176 : vector<1x8x128xf32> to vector<8x128xf32>
    %178 = vector.shape_cast %174 : vector<8x128xf32> to vector<1x8x128xf32>
    tpu.vector_store %arg8[%175, %c0_65, %c0_66], %178 {strides = array<i32>} : memref<8x8x128xf32, #tpu.memory_space<vmem>>, vector<1x8x128xf32>,
    %c3_i32 = arith.constant 3 : i32
    %c2_i32_67 = arith.constant 2 : i32
    %179 = arith.muli %c2_i32_67, %c3_i32 : i32
    %c7_i32_68 = arith.constant 7 : i32
    %180 = arith.subi %c7_i32_68, %179 : i32
    %181 = arith.muli %arg0, %180 : i32
    %182 = arith.addi %c3_i32, %181 : i32
    %183 = arith.addi %25, %182 : i32
    %c0_69 = arith.constant 0 : index
    %c0_70 = arith.constant 0 : index
    %184 = vector.load %arg9[%c0_69, %c0_70] : memref<8x128xf32, #tpu.memory_space<vmem>>, vector<8x128xf32>
    %185 = arith.index_cast %182 : i32 to index
    %c0_71 = arith.constant 0 : index
    %c0_72 = arith.constant 0 : index
    %186 = vector.load %arg10[%185, %c0_71, %c0_72] : memref<8x8x384xf32, #tpu.memory_space<vmem>>, vector<1x8x384xf32>
    %187 = vector.shape_cast %186 : vector<1x8x384xf32> to vector<8x384xf32>
    %cst_73 = arith.constant dense<0.000000e+00> : vector<8x384xf32>
    %188 = tpu.matmul %184, %20, %cst_73 {dimension_numbers = #tpu.dot_dimension_numbers<[1], [0], [0], [1], [0, 0, 1, 1], [], []>} : vector<8x128xf32>, vector<128x384xf32>, vector<8x384xf32> -> vector<8x384xf32>
    %189 = vector.extract_strided_slice %187 {offsets = [0, 0], sizes = [8, 128], strides = [1, 1]} : vector<8x384xf32> to vector<8x128xf32>
    %190 = vector.extract_strided_slice %188 {offsets = [0, 0], sizes = [8, 128], strides = [1, 1]} : vector<8x384xf32> to vector<8x128xf32>
    %191 = arith.addf %189, %190 : vector<8x128xf32>
    %192 = arith.negf %191 : vector<8x128xf32>
    %193 = math.exp %192 : vector<8x128xf32>
    %cst_74 = arith.constant 1.000000e+00 : f32
    %194 = vector.broadcast %cst_74 : f32 to vector<8x128xf32>
    %195 = arith.addf %194, %193 : vector<8x128xf32>
    %196 = arith.divf %194, %195 : vector<8x128xf32>
    %197 = vector.extract_strided_slice %187 {offsets = [0, 128], sizes = [8, 128], strides = [1, 1]} : vector<8x384xf32> to vector<8x128xf32>
    %198 = vector.extract_strided_slice %188 {offsets = [0, 128], sizes = [8, 128], strides = [1, 1]} : vector<8x384xf32> to vector<8x128xf32>
    %199 = arith.addf %197, %198 : vector<8x128xf32>
    %200 = arith.negf %199 : vector<8x128xf32>
    %201 = math.exp %200 : vector<8x128xf32>
    %cst_75 = arith.constant 1.000000e+00 : f32
    %202 = vector.broadcast %cst_75 : f32 to vector<8x128xf32>
    %203 = arith.addf %202, %201 : vector<8x128xf32>
    %204 = arith.divf %202, %203 : vector<8x128xf32>
    %205 = vector.extract_strided_slice %187 {offsets = [0, 256], sizes = [8, 128], strides = [1, 1]} : vector<8x384xf32> to vector<8x128xf32>
    %206 = vector.extract_strided_slice %188 {offsets = [0, 256], sizes = [8, 128], strides = [1, 1]} : vector<8x384xf32> to vector<8x128xf32>
    %207 = arith.addf %206, %18 : vector<8x128xf32>
    %208 = arith.mulf %196, %207 : vector<8x128xf32>
    %209 = arith.addf %205, %208 : vector<8x128xf32>
    %210 = math.tanh %209 : vector<8x128xf32>
    %cst_76 = arith.constant 1.000000e+00 : f32
    %211 = vector.broadcast %cst_76 : f32 to vector<8x128xf32>
    %212 = arith.subf %211, %204 : vector<8x128xf32>
    %213 = arith.mulf %212, %210 : vector<8x128xf32>
    %214 = arith.mulf %204, %184 : vector<8x128xf32>
    %215 = arith.addf %213, %214 : vector<8x128xf32>
    %216 = vector.broadcast %183 : i32 to vector<8x1xi32>
    %217 = arith.cmpi slt, %216, %14 : vector<8x1xi32>
    %218 = vector.shape_cast %217 : vector<8x1xi1> to vector<8x1xi1>
    %219 = vector.broadcast %218 : vector<8x1xi1> to vector<8x128xi1>
    %220 = arith.select %219, %215, %184 : vector<8x128xi1>, vector<8x128xf32>
    %c0_77 = arith.constant 0 : index
    %c0_78 = arith.constant 0 : index
    %221 = vector.load %arg9[%c0_77, %c0_78] : memref<8x128xf32, #tpu.memory_space<vmem>>, vector<8x128xf32>
    tpu.vector_store %arg9[%c0_77, %c0_78], %220 {strides = array<i32>} : memref<8x128xf32, #tpu.memory_space<vmem>>, vector<8x128xf32>,
    %cst_79 = arith.constant 0.000000e+00 : f32
    %222 = vector.shape_cast %217 : vector<8x1xi1> to vector<8x1xi1>
    %223 = vector.broadcast %222 : vector<8x1xi1> to vector<8x128xi1>
    %224 = vector.broadcast %cst_79 : f32 to vector<8x128xf32>
    %225 = arith.select %223, %220, %224 : vector<8x128xi1>, vector<8x128xf32>
    %226 = arith.index_cast %182 : i32 to index
    %c0_80 = arith.constant 0 : index
    %c0_81 = arith.constant 0 : index
    %227 = vector.load %arg8[%226, %c0_80, %c0_81] : memref<8x8x128xf32, #tpu.memory_space<vmem>>, vector<1x8x128xf32>
    %228 = vector.shape_cast %227 : vector<1x8x128xf32> to vector<8x128xf32>
    %229 = vector.shape_cast %225 : vector<8x128xf32> to vector<1x8x128xf32>
    tpu.vector_store %arg8[%226, %c0_80, %c0_81], %229 {strides = array<i32>} : memref<8x8x128xf32, #tpu.memory_space<vmem>>, vector<1x8x128xf32>,
    %c4_i32 = arith.constant 4 : i32
    %c2_i32_82 = arith.constant 2 : i32
    %230 = arith.muli %c2_i32_82, %c4_i32 : i32
    %c7_i32_83 = arith.constant 7 : i32
    %231 = arith.subi %c7_i32_83, %230 : i32
    %232 = arith.muli %arg0, %231 : i32
    %233 = arith.addi %c4_i32, %232 : i32
    %234 = arith.addi %25, %233 : i32
    %c0_84 = arith.constant 0 : index
    %c0_85 = arith.constant 0 : index
    %235 = vector.load %arg9[%c0_84, %c0_85] : memref<8x128xf32, #tpu.memory_space<vmem>>, vector<8x128xf32>
    %236 = arith.index_cast %233 : i32 to index
    %c0_86 = arith.constant 0 : index
    %c0_87 = arith.constant 0 : index
    %237 = vector.load %arg10[%236, %c0_86, %c0_87] : memref<8x8x384xf32, #tpu.memory_space<vmem>>, vector<1x8x384xf32>
    %238 = vector.shape_cast %237 : vector<1x8x384xf32> to vector<8x384xf32>
    %cst_88 = arith.constant dense<0.000000e+00> : vector<8x384xf32>
    %239 = tpu.matmul %235, %20, %cst_88 {dimension_numbers = #tpu.dot_dimension_numbers<[1], [0], [0], [1], [0, 0, 1, 1], [], []>} : vector<8x128xf32>, vector<128x384xf32>, vector<8x384xf32> -> vector<8x384xf32>
    %240 = vector.extract_strided_slice %238 {offsets = [0, 0], sizes = [8, 128], strides = [1, 1]} : vector<8x384xf32> to vector<8x128xf32>
    %241 = vector.extract_strided_slice %239 {offsets = [0, 0], sizes = [8, 128], strides = [1, 1]} : vector<8x384xf32> to vector<8x128xf32>
    %242 = arith.addf %240, %241 : vector<8x128xf32>
    %243 = arith.negf %242 : vector<8x128xf32>
    %244 = math.exp %243 : vector<8x128xf32>
    %cst_89 = arith.constant 1.000000e+00 : f32
    %245 = vector.broadcast %cst_89 : f32 to vector<8x128xf32>
    %246 = arith.addf %245, %244 : vector<8x128xf32>
    %247 = arith.divf %245, %246 : vector<8x128xf32>
    %248 = vector.extract_strided_slice %238 {offsets = [0, 128], sizes = [8, 128], strides = [1, 1]} : vector<8x384xf32> to vector<8x128xf32>
    %249 = vector.extract_strided_slice %239 {offsets = [0, 128], sizes = [8, 128], strides = [1, 1]} : vector<8x384xf32> to vector<8x128xf32>
    %250 = arith.addf %248, %249 : vector<8x128xf32>
    %251 = arith.negf %250 : vector<8x128xf32>
    %252 = math.exp %251 : vector<8x128xf32>
    %cst_90 = arith.constant 1.000000e+00 : f32
    %253 = vector.broadcast %cst_90 : f32 to vector<8x128xf32>
    %254 = arith.addf %253, %252 : vector<8x128xf32>
    %255 = arith.divf %253, %254 : vector<8x128xf32>
    %256 = vector.extract_strided_slice %238 {offsets = [0, 256], sizes = [8, 128], strides = [1, 1]} : vector<8x384xf32> to vector<8x128xf32>
    %257 = vector.extract_strided_slice %239 {offsets = [0, 256], sizes = [8, 128], strides = [1, 1]} : vector<8x384xf32> to vector<8x128xf32>
    %258 = arith.addf %257, %18 : vector<8x128xf32>
    %259 = arith.mulf %247, %258 : vector<8x128xf32>
    %260 = arith.addf %256, %259 : vector<8x128xf32>
    %261 = math.tanh %260 : vector<8x128xf32>
    %cst_91 = arith.constant 1.000000e+00 : f32
    %262 = vector.broadcast %cst_91 : f32 to vector<8x128xf32>
    %263 = arith.subf %262, %255 : vector<8x128xf32>
    %264 = arith.mulf %263, %261 : vector<8x128xf32>
    %265 = arith.mulf %255, %235 : vector<8x128xf32>
    %266 = arith.addf %264, %265 : vector<8x128xf32>
    %267 = vector.broadcast %234 : i32 to vector<8x1xi32>
    %268 = arith.cmpi slt, %267, %14 : vector<8x1xi32>
    %269 = vector.shape_cast %268 : vector<8x1xi1> to vector<8x1xi1>
    %270 = vector.broadcast %269 : vector<8x1xi1> to vector<8x128xi1>
    %271 = arith.select %270, %266, %235 : vector<8x128xi1>, vector<8x128xf32>
    %c0_92 = arith.constant 0 : index
    %c0_93 = arith.constant 0 : index
    %272 = vector.load %arg9[%c0_92, %c0_93] : memref<8x128xf32, #tpu.memory_space<vmem>>, vector<8x128xf32>
    tpu.vector_store %arg9[%c0_92, %c0_93], %271 {strides = array<i32>} : memref<8x128xf32, #tpu.memory_space<vmem>>, vector<8x128xf32>,
    %cst_94 = arith.constant 0.000000e+00 : f32
    %273 = vector.shape_cast %268 : vector<8x1xi1> to vector<8x1xi1>
    %274 = vector.broadcast %273 : vector<8x1xi1> to vector<8x128xi1>
    %275 = vector.broadcast %cst_94 : f32 to vector<8x128xf32>
    %276 = arith.select %274, %271, %275 : vector<8x128xi1>, vector<8x128xf32>
    %277 = arith.index_cast %233 : i32 to index
    %c0_95 = arith.constant 0 : index
    %c0_96 = arith.constant 0 : index
    %278 = vector.load %arg8[%277, %c0_95, %c0_96] : memref<8x8x128xf32, #tpu.memory_space<vmem>>, vector<1x8x128xf32>
    %279 = vector.shape_cast %278 : vector<1x8x128xf32> to vector<8x128xf32>
    %280 = vector.shape_cast %276 : vector<8x128xf32> to vector<1x8x128xf32>
    tpu.vector_store %arg8[%277, %c0_95, %c0_96], %280 {strides = array<i32>} : memref<8x8x128xf32, #tpu.memory_space<vmem>>, vector<1x8x128xf32>,
    %c5_i32 = arith.constant 5 : i32
    %c2_i32_97 = arith.constant 2 : i32
    %281 = arith.muli %c2_i32_97, %c5_i32 : i32
    %c7_i32_98 = arith.constant 7 : i32
    %282 = arith.subi %c7_i32_98, %281 : i32
    %283 = arith.muli %arg0, %282 : i32
    %284 = arith.addi %c5_i32, %283 : i32
    %285 = arith.addi %25, %284 : i32
    %c0_99 = arith.constant 0 : index
    %c0_100 = arith.constant 0 : index
    %286 = vector.load %arg9[%c0_99, %c0_100] : memref<8x128xf32, #tpu.memory_space<vmem>>, vector<8x128xf32>
    %287 = arith.index_cast %284 : i32 to index
    %c0_101 = arith.constant 0 : index
    %c0_102 = arith.constant 0 : index
    %288 = vector.load %arg10[%287, %c0_101, %c0_102] : memref<8x8x384xf32, #tpu.memory_space<vmem>>, vector<1x8x384xf32>
    %289 = vector.shape_cast %288 : vector<1x8x384xf32> to vector<8x384xf32>
    %cst_103 = arith.constant dense<0.000000e+00> : vector<8x384xf32>
    %290 = tpu.matmul %286, %20, %cst_103 {dimension_numbers = #tpu.dot_dimension_numbers<[1], [0], [0], [1], [0, 0, 1, 1], [], []>} : vector<8x128xf32>, vector<128x384xf32>, vector<8x384xf32> -> vector<8x384xf32>
    %291 = vector.extract_strided_slice %289 {offsets = [0, 0], sizes = [8, 128], strides = [1, 1]} : vector<8x384xf32> to vector<8x128xf32>
    %292 = vector.extract_strided_slice %290 {offsets = [0, 0], sizes = [8, 128], strides = [1, 1]} : vector<8x384xf32> to vector<8x128xf32>
    %293 = arith.addf %291, %292 : vector<8x128xf32>
    %294 = arith.negf %293 : vector<8x128xf32>
    %295 = math.exp %294 : vector<8x128xf32>
    %cst_104 = arith.constant 1.000000e+00 : f32
    %296 = vector.broadcast %cst_104 : f32 to vector<8x128xf32>
    %297 = arith.addf %296, %295 : vector<8x128xf32>
    %298 = arith.divf %296, %297 : vector<8x128xf32>
    %299 = vector.extract_strided_slice %289 {offsets = [0, 128], sizes = [8, 128], strides = [1, 1]} : vector<8x384xf32> to vector<8x128xf32>
    %300 = vector.extract_strided_slice %290 {offsets = [0, 128], sizes = [8, 128], strides = [1, 1]} : vector<8x384xf32> to vector<8x128xf32>
    %301 = arith.addf %299, %300 : vector<8x128xf32>
    %302 = arith.negf %301 : vector<8x128xf32>
    %303 = math.exp %302 : vector<8x128xf32>
    %cst_105 = arith.constant 1.000000e+00 : f32
    %304 = vector.broadcast %cst_105 : f32 to vector<8x128xf32>
    %305 = arith.addf %304, %303 : vector<8x128xf32>
    %306 = arith.divf %304, %305 : vector<8x128xf32>
    %307 = vector.extract_strided_slice %289 {offsets = [0, 256], sizes = [8, 128], strides = [1, 1]} : vector<8x384xf32> to vector<8x128xf32>
    %308 = vector.extract_strided_slice %290 {offsets = [0, 256], sizes = [8, 128], strides = [1, 1]} : vector<8x384xf32> to vector<8x128xf32>
    %309 = arith.addf %308, %18 : vector<8x128xf32>
    %310 = arith.mulf %298, %309 : vector<8x128xf32>
    %311 = arith.addf %307, %310 : vector<8x128xf32>
    %312 = math.tanh %311 : vector<8x128xf32>
    %cst_106 = arith.constant 1.000000e+00 : f32
    %313 = vector.broadcast %cst_106 : f32 to vector<8x128xf32>
    %314 = arith.subf %313, %306 : vector<8x128xf32>
    %315 = arith.mulf %314, %312 : vector<8x128xf32>
    %316 = arith.mulf %306, %286 : vector<8x128xf32>
    %317 = arith.addf %315, %316 : vector<8x128xf32>
    %318 = vector.broadcast %285 : i32 to vector<8x1xi32>
    %319 = arith.cmpi slt, %318, %14 : vector<8x1xi32>
    %320 = vector.shape_cast %319 : vector<8x1xi1> to vector<8x1xi1>
    %321 = vector.broadcast %320 : vector<8x1xi1> to vector<8x128xi1>
    %322 = arith.select %321, %317, %286 : vector<8x128xi1>, vector<8x128xf32>
    %c0_107 = arith.constant 0 : index
    %c0_108 = arith.constant 0 : index
    %323 = vector.load %arg9[%c0_107, %c0_108] : memref<8x128xf32, #tpu.memory_space<vmem>>, vector<8x128xf32>
    tpu.vector_store %arg9[%c0_107, %c0_108], %322 {strides = array<i32>} : memref<8x128xf32, #tpu.memory_space<vmem>>, vector<8x128xf32>,
    %cst_109 = arith.constant 0.000000e+00 : f32
    %324 = vector.shape_cast %319 : vector<8x1xi1> to vector<8x1xi1>
    %325 = vector.broadcast %324 : vector<8x1xi1> to vector<8x128xi1>
    %326 = vector.broadcast %cst_109 : f32 to vector<8x128xf32>
    %327 = arith.select %325, %322, %326 : vector<8x128xi1>, vector<8x128xf32>
    %328 = arith.index_cast %284 : i32 to index
    %c0_110 = arith.constant 0 : index
    %c0_111 = arith.constant 0 : index
    %329 = vector.load %arg8[%328, %c0_110, %c0_111] : memref<8x8x128xf32, #tpu.memory_space<vmem>>, vector<1x8x128xf32>
    %330 = vector.shape_cast %329 : vector<1x8x128xf32> to vector<8x128xf32>
    %331 = vector.shape_cast %327 : vector<8x128xf32> to vector<1x8x128xf32>
    tpu.vector_store %arg8[%328, %c0_110, %c0_111], %331 {strides = array<i32>} : memref<8x8x128xf32, #tpu.memory_space<vmem>>, vector<1x8x128xf32>,
    %c6_i32 = arith.constant 6 : i32
    %c2_i32_112 = arith.constant 2 : i32
    %332 = arith.muli %c2_i32_112, %c6_i32 : i32
    %c7_i32_113 = arith.constant 7 : i32
    %333 = arith.subi %c7_i32_113, %332 : i32
    %334 = arith.muli %arg0, %333 : i32
    %335 = arith.addi %c6_i32, %334 : i32
    %336 = arith.addi %25, %335 : i32
    %c0_114 = arith.constant 0 : index
    %c0_115 = arith.constant 0 : index
    %337 = vector.load %arg9[%c0_114, %c0_115] : memref<8x128xf32, #tpu.memory_space<vmem>>, vector<8x128xf32>
    %338 = arith.index_cast %335 : i32 to index
    %c0_116 = arith.constant 0 : index
    %c0_117 = arith.constant 0 : index
    %339 = vector.load %arg10[%338, %c0_116, %c0_117] : memref<8x8x384xf32, #tpu.memory_space<vmem>>, vector<1x8x384xf32>
    %340 = vector.shape_cast %339 : vector<1x8x384xf32> to vector<8x384xf32>
    %cst_118 = arith.constant dense<0.000000e+00> : vector<8x384xf32>
    %341 = tpu.matmul %337, %20, %cst_118 {dimension_numbers = #tpu.dot_dimension_numbers<[1], [0], [0], [1], [0, 0, 1, 1], [], []>} : vector<8x128xf32>, vector<128x384xf32>, vector<8x384xf32> -> vector<8x384xf32>
    %342 = vector.extract_strided_slice %340 {offsets = [0, 0], sizes = [8, 128], strides = [1, 1]} : vector<8x384xf32> to vector<8x128xf32>
    %343 = vector.extract_strided_slice %341 {offsets = [0, 0], sizes = [8, 128], strides = [1, 1]} : vector<8x384xf32> to vector<8x128xf32>
    %344 = arith.addf %342, %343 : vector<8x128xf32>
    %345 = arith.negf %344 : vector<8x128xf32>
    %346 = math.exp %345 : vector<8x128xf32>
    %cst_119 = arith.constant 1.000000e+00 : f32
    %347 = vector.broadcast %cst_119 : f32 to vector<8x128xf32>
    %348 = arith.addf %347, %346 : vector<8x128xf32>
    %349 = arith.divf %347, %348 : vector<8x128xf32>
    %350 = vector.extract_strided_slice %340 {offsets = [0, 128], sizes = [8, 128], strides = [1, 1]} : vector<8x384xf32> to vector<8x128xf32>
    %351 = vector.extract_strided_slice %341 {offsets = [0, 128], sizes = [8, 128], strides = [1, 1]} : vector<8x384xf32> to vector<8x128xf32>
    %352 = arith.addf %350, %351 : vector<8x128xf32>
    %353 = arith.negf %352 : vector<8x128xf32>
    %354 = math.exp %353 : vector<8x128xf32>
    %cst_120 = arith.constant 1.000000e+00 : f32
    %355 = vector.broadcast %cst_120 : f32 to vector<8x128xf32>
    %356 = arith.addf %355, %354 : vector<8x128xf32>
    %357 = arith.divf %355, %356 : vector<8x128xf32>
    %358 = vector.extract_strided_slice %340 {offsets = [0, 256], sizes = [8, 128], strides = [1, 1]} : vector<8x384xf32> to vector<8x128xf32>
    %359 = vector.extract_strided_slice %341 {offsets = [0, 256], sizes = [8, 128], strides = [1, 1]} : vector<8x384xf32> to vector<8x128xf32>
    %360 = arith.addf %359, %18 : vector<8x128xf32>
    %361 = arith.mulf %349, %360 : vector<8x128xf32>
    %362 = arith.addf %358, %361 : vector<8x128xf32>
    %363 = math.tanh %362 : vector<8x128xf32>
    %cst_121 = arith.constant 1.000000e+00 : f32
    %364 = vector.broadcast %cst_121 : f32 to vector<8x128xf32>
    %365 = arith.subf %364, %357 : vector<8x128xf32>
    %366 = arith.mulf %365, %363 : vector<8x128xf32>
    %367 = arith.mulf %357, %337 : vector<8x128xf32>
    %368 = arith.addf %366, %367 : vector<8x128xf32>
    %369 = vector.broadcast %336 : i32 to vector<8x1xi32>
    %370 = arith.cmpi slt, %369, %14 : vector<8x1xi32>
    %371 = vector.shape_cast %370 : vector<8x1xi1> to vector<8x1xi1>
    %372 = vector.broadcast %371 : vector<8x1xi1> to vector<8x128xi1>
    %373 = arith.select %372, %368, %337 : vector<8x128xi1>, vector<8x128xf32>
    %c0_122 = arith.constant 0 : index
    %c0_123 = arith.constant 0 : index
    %374 = vector.load %arg9[%c0_122, %c0_123] : memref<8x128xf32, #tpu.memory_space<vmem>>, vector<8x128xf32>
    tpu.vector_store %arg9[%c0_122, %c0_123], %373 {strides = array<i32>} : memref<8x128xf32, #tpu.memory_space<vmem>>, vector<8x128xf32>,
    %cst_124 = arith.constant 0.000000e+00 : f32
    %375 = vector.shape_cast %370 : vector<8x1xi1> to vector<8x1xi1>
    %376 = vector.broadcast %375 : vector<8x1xi1> to vector<8x128xi1>
    %377 = vector.broadcast %cst_124 : f32 to vector<8x128xf32>
    %378 = arith.select %376, %373, %377 : vector<8x128xi1>, vector<8x128xf32>
    %379 = arith.index_cast %335 : i32 to index
    %c0_125 = arith.constant 0 : index
    %c0_126 = arith.constant 0 : index
    %380 = vector.load %arg8[%379, %c0_125, %c0_126] : memref<8x8x128xf32, #tpu.memory_space<vmem>>, vector<1x8x128xf32>
    %381 = vector.shape_cast %380 : vector<1x8x128xf32> to vector<8x128xf32>
    %382 = vector.shape_cast %378 : vector<8x128xf32> to vector<1x8x128xf32>
    tpu.vector_store %arg8[%379, %c0_125, %c0_126], %382 {strides = array<i32>} : memref<8x8x128xf32, #tpu.memory_space<vmem>>, vector<1x8x128xf32>,
    %c7_i32_127 = arith.constant 7 : i32
    %c2_i32_128 = arith.constant 2 : i32
    %383 = arith.muli %c2_i32_128, %c7_i32_127 : i32
    %c7_i32_129 = arith.constant 7 : i32
    %384 = arith.subi %c7_i32_129, %383 : i32
    %385 = arith.muli %arg0, %384 : i32
    %386 = arith.addi %c7_i32_127, %385 : i32
    %387 = arith.addi %25, %386 : i32
    %c0_130 = arith.constant 0 : index
    %c0_131 = arith.constant 0 : index
    %388 = vector.load %arg9[%c0_130, %c0_131] : memref<8x128xf32, #tpu.memory_space<vmem>>, vector<8x128xf32>
    %389 = arith.index_cast %386 : i32 to index
    %c0_132 = arith.constant 0 : index
    %c0_133 = arith.constant 0 : index
    %390 = vector.load %arg10[%389, %c0_132, %c0_133] : memref<8x8x384xf32, #tpu.memory_space<vmem>>, vector<1x8x384xf32>
    %391 = vector.shape_cast %390 : vector<1x8x384xf32> to vector<8x384xf32>
    %cst_134 = arith.constant dense<0.000000e+00> : vector<8x384xf32>
    %392 = tpu.matmul %388, %20, %cst_134 {dimension_numbers = #tpu.dot_dimension_numbers<[1], [0], [0], [1], [0, 0, 1, 1], [], []>} : vector<8x128xf32>, vector<128x384xf32>, vector<8x384xf32> -> vector<8x384xf32>
    %393 = vector.extract_strided_slice %391 {offsets = [0, 0], sizes = [8, 128], strides = [1, 1]} : vector<8x384xf32> to vector<8x128xf32>
    %394 = vector.extract_strided_slice %392 {offsets = [0, 0], sizes = [8, 128], strides = [1, 1]} : vector<8x384xf32> to vector<8x128xf32>
    %395 = arith.addf %393, %394 : vector<8x128xf32>
    %396 = arith.negf %395 : vector<8x128xf32>
    %397 = math.exp %396 : vector<8x128xf32>
    %cst_135 = arith.constant 1.000000e+00 : f32
    %398 = vector.broadcast %cst_135 : f32 to vector<8x128xf32>
    %399 = arith.addf %398, %397 : vector<8x128xf32>
    %400 = arith.divf %398, %399 : vector<8x128xf32>
    %401 = vector.extract_strided_slice %391 {offsets = [0, 128], sizes = [8, 128], strides = [1, 1]} : vector<8x384xf32> to vector<8x128xf32>
    %402 = vector.extract_strided_slice %392 {offsets = [0, 128], sizes = [8, 128], strides = [1, 1]} : vector<8x384xf32> to vector<8x128xf32>
    %403 = arith.addf %401, %402 : vector<8x128xf32>
    %404 = arith.negf %403 : vector<8x128xf32>
    %405 = math.exp %404 : vector<8x128xf32>
    %cst_136 = arith.constant 1.000000e+00 : f32
    %406 = vector.broadcast %cst_136 : f32 to vector<8x128xf32>
    %407 = arith.addf %406, %405 : vector<8x128xf32>
    %408 = arith.divf %406, %407 : vector<8x128xf32>
    %409 = vector.extract_strided_slice %391 {offsets = [0, 256], sizes = [8, 128], strides = [1, 1]} : vector<8x384xf32> to vector<8x128xf32>
    %410 = vector.extract_strided_slice %392 {offsets = [0, 256], sizes = [8, 128], strides = [1, 1]} : vector<8x384xf32> to vector<8x128xf32>
    %411 = arith.addf %410, %18 : vector<8x128xf32>
    %412 = arith.mulf %400, %411 : vector<8x128xf32>
    %413 = arith.addf %409, %412 : vector<8x128xf32>
    %414 = math.tanh %413 : vector<8x128xf32>
    %cst_137 = arith.constant 1.000000e+00 : f32
    %415 = vector.broadcast %cst_137 : f32 to vector<8x128xf32>
    %416 = arith.subf %415, %408 : vector<8x128xf32>
    %417 = arith.mulf %416, %414 : vector<8x128xf32>
    %418 = arith.mulf %408, %388 : vector<8x128xf32>
    %419 = arith.addf %417, %418 : vector<8x128xf32>
    %420 = vector.broadcast %387 : i32 to vector<8x1xi32>
    %421 = arith.cmpi slt, %420, %14 : vector<8x1xi32>
    %422 = vector.shape_cast %421 : vector<8x1xi1> to vector<8x1xi1>
    %423 = vector.broadcast %422 : vector<8x1xi1> to vector<8x128xi1>
    %424 = arith.select %423, %419, %388 : vector<8x128xi1>, vector<8x128xf32>
    %c0_138 = arith.constant 0 : index
    %c0_139 = arith.constant 0 : index
    %425 = vector.load %arg9[%c0_138, %c0_139] : memref<8x128xf32, #tpu.memory_space<vmem>>, vector<8x128xf32>
    tpu.vector_store %arg9[%c0_138, %c0_139], %424 {strides = array<i32>} : memref<8x128xf32, #tpu.memory_space<vmem>>, vector<8x128xf32>,
    %cst_140 = arith.constant 0.000000e+00 : f32
    %426 = vector.shape_cast %421 : vector<8x1xi1> to vector<8x1xi1>
    %427 = vector.broadcast %426 : vector<8x1xi1> to vector<8x128xi1>
    %428 = vector.broadcast %cst_140 : f32 to vector<8x128xf32>
    %429 = arith.select %427, %424, %428 : vector<8x128xi1>, vector<8x128xf32>
    %430 = arith.index_cast %386 : i32 to index
    %c0_141 = arith.constant 0 : index
    %c0_142 = arith.constant 0 : index
    %431 = vector.load %arg8[%430, %c0_141, %c0_142] : memref<8x8x128xf32, #tpu.memory_space<vmem>>, vector<1x8x128xf32>
    %432 = vector.shape_cast %431 : vector<1x8x128xf32> to vector<8x128xf32>
    %433 = vector.shape_cast %429 : vector<8x128xf32> to vector<1x8x128xf32>
    tpu.vector_store %arg8[%430, %c0_141, %c0_142], %433 {strides = array<i32>} : memref<8x8x128xf32, #tpu.memory_space<vmem>>, vector<1x8x128xf32>,
    %c8_i32_143 = arith.constant 8 : i32
    return
  }
  func.func @transform_0(%arg0: i32, %arg1: i32) -> (i32, i32) {
    %c0_i32 = arith.constant 0 : i32
    %c0_i32_0 = arith.constant 0 : i32
    %c0_i32_1 = arith.constant 0 : i32
    return %c0_i32, %c0_i32_0 : i32, i32
  }
  func.func @transform_1(%arg0: i32, %arg1: i32) -> (i32, i32, i32) {
    %c2_i32 = arith.constant 2 : i32
    %0 = arith.muli %c2_i32, %arg1 : i32
    %c0_i32 = arith.constant 0 : i32
    %1 = arith.subi %c0_i32, %0 : i32
    %2 = arith.muli %arg0, %1 : i32
    %3 = arith.addi %arg1, %2 : i32
    %c0_i32_0 = arith.constant 0 : i32
    %c0_i32_1 = arith.constant 0 : i32
    %c0_i32_2 = arith.constant 0 : i32
    return %3, %c0_i32_0, %c0_i32_1 : i32, i32, i32
  }
  func.func @transform_2(%arg0: i32, %arg1: i32) -> (i32, i32, i32) {
    %c0_i32 = arith.constant 0 : i32
    %c0_i32_0 = arith.constant 0 : i32
    %c0_i32_1 = arith.constant 0 : i32
    return %arg0, %c0_i32, %c0_i32_0 : i32, i32, i32
  }
  func.func @transform_3(%arg0: i32, %arg1: i32) -> (i32, i32, i32) {
    %c0_i32 = arith.constant 0 : i32
    %c0_i32_0 = arith.constant 0 : i32
    %c0_i32_1 = arith.constant 0 : i32
    return %arg0, %c0_i32, %c0_i32_0 : i32, i32, i32
  }
  func.func @transform_4(%arg0: i32, %arg1: i32) -> (i32, i32, i32) {
    %c0_i32 = arith.constant 0 : i32
    %c0_i32_0 = arith.constant 0 : i32
    %c0_i32_1 = arith.constant 0 : i32
    return %arg0, %c0_i32, %c0_i32_0 : i32, i32, i32
  }
  func.func @transform_5(%arg0: i32, %arg1: i32) -> (i32, i32, i32) {
    %c0_i32 = arith.constant 0 : i32
    %c0_i32_0 = arith.constant 0 : i32
    %c0_i32_1 = arith.constant 0 : i32
    return %arg0, %c0_i32, %c0_i32_0 : i32, i32, i32
  }
  func.func @transform_6(%arg0: i32, %arg1: i32) -> (i32, i32, i32) {
    %c2_i32 = arith.constant 2 : i32
    %0 = arith.muli %c2_i32, %arg1 : i32
    %c0_i32 = arith.constant 0 : i32
    %1 = arith.subi %c0_i32, %0 : i32
    %2 = arith.muli %arg0, %1 : i32
    %3 = arith.addi %arg1, %2 : i32
    %c0_i32_0 = arith.constant 0 : i32
    %c0_i32_1 = arith.constant 0 : i32
    return %3, %c0_i32_0, %arg0 : i32, i32, i32
  }
}

</mosaic_0001>

<llo_original>
// kernel: tpu_custom_call.1
$region0: #{tpu_custom_call.1}
  #allocation0 [shape = 'u32[]', space=smem, size = 0x4, offset = 0x4, fixed_abs, tag = 'smem constant byte address 0x4 - core index']
  #allocation1 [shape = 'u32[72,128]{1,0:T(1,128)}', space=vmem, size = 0x9000, scoped, tag = 'internal scratch']
  #allocation2 [shape = 'f32[8,128]{1,0:T(8,128)}', space=vmem, size = 0x1000, scoped, tag = 'scratch operand']
  #allocation3 [shape = 'f32[8,8,384]{2,1,0:T(8,128)}', space=vmem, size = 0x18000, scoped, tag = 'scratch operand']
  %s0 = inlined_call_operand.vmem [shape: s32[8,1], index: 0, kind: input, shape index: {}]
  %s1 = inlined_call_operand.hbm [shape: f32[8,8,16], index: 1, kind: input, shape index: {}]
  %s2 = inlined_call_operand.hbm [shape: f32[2,16,384], index: 2, kind: input, shape index: {}]
  %s3 = inlined_call_operand.hbm [shape: f32[2,128,384], index: 3, kind: input, shape index: {}]
  %s4 = inlined_call_operand.vmem [shape: f32[2,1,384], index: 4, kind: input, shape index: {}]
  %s5 = inlined_call_operand.vmem [shape: f32[2,1,128], index: 5, kind: input, shape index: {}]
  %s6 = inlined_call_operand.hbm [shape: f32[8,8,256], index: 6, kind: output, shape index: {}]
  %s7 = sld [smem:[#allocation0]]
  $region73: #{tpu_custom_call.1} parent=0
    _
  %s9 = ssub.s32 1, %s7
  %s10 = scalar_select 0, %s9, %s7
  $region1: #{tpu_custom_call.1} parent=0
    #allocation4 [shape = 'u8[65536]{0}', space=vmem, size = 0x10000, scoped, tag = 'input window, operand 1']
    #allocation5 [shape = 's32[2]{0}', space=sflag, size = 0x8, scoped, tag = 'scoped memory for tpu_custom_call.1']
    #allocation6 [shape = 's32[2]{0}', space=sflag, size = 0x8, scoped, tag = 'scoped memory for tpu_custom_call.1']
    #allocation7 [shape = 'u8[49152]{0}', space=vmem, size = 0xc000, scoped, tag = 'input window, operand 2']
    #allocation8 [shape = 's32[2]{0}', space=sflag, size = 0x8, scoped, tag = 'scoped memory for tpu_custom_call.1']
    #allocation9 [shape = 'u8[393216]{0}', space=vmem, size = 0x60000, scoped, tag = 'input window, operand 3']
    #allocation10 [shape = 'u8[65536]{0}', space=vmem, size = 0x10000, scoped, tag = 'output window, operand 0']
    %11 = vsyncpa [#allocation5], 0
    %s12 = scalar_lea.sflag [#allocation5], 1
    %13 = vsyncpa %s12, 0
    %14 = vsyncpa [#allocation8], 0
    %s15 = scalar_lea.sflag [#allocation8], 1
    %16 = vsyncpa %s15, 0
    %17 = vsyncpa [#allocation6], 0
    %s18 = scalar_lea.sflag [#allocation6], 1
    %19 = vsyncpa %s18, 0
    loop: start=0, step=1, limit=4
    $region2: #{tpu_custom_call.1} parent=1 // loop_pre_header
      _
    $region3: #{tpu_custom_call.1} parent=1 // loop_header
      %s21 = sphi 0, %s25
      %p22 = scmp.ge.s32.totalorder %s21, 4
      %s28 = sphi 0, %s40
      %s29 = sphi 0, %s36
      %s30 = sphi 0, %s28
      %s31 = sphi 0, %s29
      %s32 = sphi 0, %s30
      %s33 = sphi 0, %s31
      %s41 = sphi 0, %s41
      %s43 = sphi 0, %s41
      %s44 = sphi 0, %s43
      %s58 = sphi 0, %s44
      %s72 = sphi 0, %s74
      %s75 = sphi 0, %s72
      %s76 = sphi 0, %s75
      %s92 = sphi 0, %s76
      %s98 = sphi 0, %s100
      %s101 = sphi 0, %s98
      %s102 = sphi 0, %s101
      %s118 = sphi 0, %s102
      %s124 = sphi 0, %s126
      %s127 = sphi 0, %s124
      %s128 = sphi 0, %s127
      %s144 = sphi 0, %s128
      %s150 = sphi 0, %s152
      %s153 = sphi 0, %s150
      %s154 = sphi 0, %s153
      %s170 = sphi 0, %s154
      %s176 = sphi 0, %s178
      %s179 = sphi 0, %s176
      %s180 = sphi 0, %s179
      %s196 = sphi 0, %s180
      %s212 = sphi 0, %s214
      %s215 = sphi 0, %s212
      %s216 = sphi 0, %s215
      %s232 = sphi 0, %s216
    $region4: #{tpu_custom_call.1} parent=1 // loop_header_branch
      %24 = sbr.rel (%p22) target = $region8
    $region5: #{tpu_custom_call.1} parent=1 // loop_body
      %s26 = ssub.s32 %s21, 1
      %s27 = ssub.s32 %s21, 2
      %s34 = sadd.s32 1, %s29
      %p35 = scmp.ge.s32.totalorder %s34, 1
      %s36 = scalar_select %p35, 0, %s34
      %s37 = sadd.s32 1, %s28
      %s38 = scalar_select %p35, %s37, %s28
      %p39 = scmp.ge.s32.totalorder %s38, 2
      %s40 = scalar_select %p39, 0, %s38
      %s42 = sadd.s32 %s41, 1
      %p45 = scmp.eq.s32.totalorder %s21, 1
      %p46 = scmp.ne.s32.totalorder %s41, %s43
      %p47 = scmp.eq.s32.totalorder %s21, 0
      %p48 = por %p46, %p47
      %p49 = scmp.ne.s32.totalorder %s41, %s43
      %p50 = scmp.eq.s32.totalorder %s26, 1
      %p51 = por %p49, %p50
      %p52 = scmp.ne.s32.totalorder %s43, %s44
      %p53 = scmp.eq.s32.totalorder %s26, 0
      %p54 = por %p52, %p53
      %p55 = scmp.ne.s32.totalorder %s43, %s44
      %p56 = scmp.eq.s32.totalorder %s27, 1
      %p57 = por %p55, %p56
      %p59 = scmp.ne.s32.totalorder %s44, %s58
      %p60 = scmp.eq.s32.totalorder %s27, 0
      %p61 = por %p59, %p60
      %s62 = smul.u32 %s29, 2
      %s63 = ssub.s32 0, %s62
      %s64 = smul.u32 %s28, %s63
      %s65 = sadd.s32 %s29, %s64
      %s66 = smul.u32 %s36, 2
      %s67 = ssub.s32 0, %s66
      %s68 = smul.u32 %s40, %s67
      %s69 = sadd.s32 %s36, %s68
      %s70 = ssub.s32 %s65, %s69
      %p71 = scmp.eq.s32.totalorder %s70, 0
      %s73 = sadd.s32 %s72, 1
      %s74 = scalar_select %p71, %s72, %s73
      %p77 = pneg %p71
      %p78 = scmp.eq.s32.totalorder %s21, 1
      %p79 = por %p77, %p78
      %p80 = scmp.ne.s32.totalorder %s72, %s75
      %p81 = scmp.eq.s32.totalorder %s21, 0
      %p82 = por %p80, %p81
      %p83 = scmp.ne.s32.totalorder %s72, %s75
      %p84 = scmp.eq.s32.totalorder %s26, 1
      %p85 = por %p83, %p84
      %p86 = scmp.ne.s32.totalorder %s75, %s76
      %p87 = scmp.eq.s32.totalorder %s26, 0
      %p88 = por %p86, %p87
      %p89 = scmp.ne.s32.totalorder %s75, %s76
      %p90 = scmp.eq.s32.totalorder %s27, 1
      %p91 = por %p89, %p90
      %p93 = scmp.ne.s32.totalorder %s76, %s92
      %p94 = scmp.eq.s32.totalorder %s27, 0
      %p95 = por %p93, %p94
      %s96 = ssub.s32 %s28, %s40
      %p97 = scmp.eq.s32.totalorder %s96, 0
      %s99 = sadd.s32 %s98, 1
      %s100 = scalar_select %p97, %s98, %s99
      %p103 = pneg %p97
      %p104 = scmp.eq.s32.totalorder %s21, 1
      %p105 = por %p103, %p104
      %p106 = scmp.ne.s32.totalorder %s98, %s101
      %p107 = scmp.eq.s32.totalorder %s21, 0
      %p108 = por %p106, %p107
      %p109 = scmp.ne.s32.totalorder %s98, %s101
      %p110 = scmp.eq.s32.totalorder %s26, 1
      %p111 = por %p109, %p110
      %p112 = scmp.ne.s32.totalorder %s101, %s102
      %p113 = scmp.eq.s32.totalorder %s26, 0
      %p114 = por %p112, %p113
      %p115 = scmp.ne.s32.totalorder %s101, %s102
      %p116 = scmp.eq.s32.totalorder %s27, 1
      %p117 = por %p115, %p116
      %p119 = scmp.ne.s32.totalorder %s102, %s118
      %p120 = scmp.eq.s32.totalorder %s27, 0
      %p121 = por %p119, %p120
      %s122 = ssub.s32 %s28, %s40
      %p123 = scmp.eq.s32.totalorder %s122, 0
      %s125 = sadd.s32 %s124, 1
      %s126 = scalar_select %p123, %s124, %s125
      %p129 = pneg %p123
      %p130 = scmp.eq.s32.totalorder %s21, 1
      %p131 = por %p129, %p130
      %p132 = scmp.ne.s32.totalorder %s124, %s127
      %p133 = scmp.eq.s32.totalorder %s21, 0
      %p134 = por %p132, %p133
      %p135 = scmp.ne.s32.totalorder %s124, %s127
      %p136 = scmp.eq.s32.totalorder %s26, 1
      %p137 = por %p135, %p136
      %p138 = scmp.ne.s32.totalorder %s127, %s128
      %p139 = scmp.eq.s32.totalorder %s26, 0
      %p140 = por %p138, %p139
      %p141 = scmp.ne.s32.totalorder %s127, %s128
      %p142 = scmp.eq.s32.totalorder %s27, 1
      %p143 = por %p141, %p142
      %p145 = scmp.ne.s32.totalorder %s128, %s144
      %p146 = scmp.eq.s32.totalorder %s27, 0
      %p147 = por %p145, %p146
      %s148 = ssub.s32 %s28, %s40
      %p149 = scmp.eq.s32.totalorder %s148, 0
      %s151 = sadd.s32 %s150, 1
      %s152 = scalar_select %p149, %s150, %s151
      %p155 = pneg %p149
      %p156 = scmp.eq.s32.totalorder %s21, 1
      %p157 = por %p155, %p156
      %p158 = scmp.ne.s32.totalorder %s150, %s153
      %p159 = scmp.eq.s32.totalorder %s21, 0
      %p160 = por %p158, %p159
      %p161 = scmp.ne.s32.totalorder %s150, %s153
      %p162 = scmp.eq.s32.totalorder %s26, 1
      %p163 = por %p161, %p162
      %p164 = scmp.ne.s32.totalorder %s153, %s154
      %p165 = scmp.eq.s32.totalorder %s26, 0
      %p166 = por %p164, %p165
      %p167 = scmp.ne.s32.totalorder %s153, %s154
      %p168 = scmp.eq.s32.totalorder %s27, 1
      %p169 = por %p167, %p168
      %p171 = scmp.ne.s32.totalorder %s154, %s170
      %p172 = scmp.eq.s32.totalorder %s27, 0
      %p173 = por %p171, %p172
      %s174 = ssub.s32 %s28, %s40
      %p175 = scmp.eq.s32.totalorder %s174, 0
      %s177 = sadd.s32 %s176, 1
      %s178 = scalar_select %p175, %s176, %s177
      %p181 = pneg %p175
      %p182 = scmp.eq.s32.totalorder %s21, 1
      %p183 = por %p181, %p182
      %p184 = scmp.ne.s32.totalorder %s176, %s179
      %p185 = scmp.eq.s32.totalorder %s21, 0
      %p186 = por %p184, %p185
      %p187 = scmp.ne.s32.totalorder %s176, %s179
      %p188 = scmp.eq.s32.totalorder %s26, 1
      %p189 = por %p187, %p188
      %p190 = scmp.ne.s32.totalorder %s179, %s180
      %p191 = scmp.eq.s32.totalorder %s26, 0
      %p192 = por %p190, %p191
      %p193 = scmp.ne.s32.totalorder %s179, %s180
      %p194 = scmp.eq.s32.totalorder %s27, 1
      %p195 = por %p193, %p194
      %p197 = scmp.ne.s32.totalorder %s180, %s196
      %p198 = scmp.eq.s32.totalorder %s27, 0
      %p199 = por %p197, %p198
      %s200 = smul.u32 %s29, 2
      %s201 = ssub.s32 0, %s200
      %s202 = smul.u32 %s28, %s201
      %s203 = sadd.s32 %s29, %s202
      %s204 = smul.u32 %s36, 2
      %s205 = ssub.s32 0, %s204
      %s206 = smul.u32 %s40, %s205
      %s207 = sadd.s32 %s36, %s206
      %s208 = ssub.s32 %s203, %s207
      %s209 = ssub.s32 %s28, %s40
      %s210 = sor.u32 %s208, %s209
      %p211 = scmp.eq.s32.totalorder %s210, 0
      %s213 = sadd.s32 %s212, 1
      %s214 = scalar_select %p211, %s212, %s213
      %p217 = pneg %p211
      %p218 = scmp.eq.s32.totalorder %s21, 1
      %p219 = por %p217, %p218
      %p220 = scmp.ne.s32.totalorder %s212, %s215
      %p221 = scmp.eq.s32.totalorder %s21, 0
      %p222 = por %p220, %p221
      %p223 = scmp.ne.s32.totalorder %s212, %s215
      %p224 = scmp.eq.s32.totalorder %s26, 1
      %p225 = por %p223, %p224
      %p226 = scmp.ne.s32.totalorder %s215, %s216
      %p227 = scmp.eq.s32.totalorder %s26, 0
      %p228 = por %p226, %p227
      %p229 = scmp.ne.s32.totalorder %s215, %s216
      %p230 = scmp.eq.s32.totalorder %s27, 1
      %p231 = por %p229, %p230
      %p233 = scmp.ne.s32.totalorder %s216, %s232
      %p234 = scmp.eq.s32.totalorder %s27, 0
      %p235 = por %p233, %p234
      %p236 = scmp.le.s32.totalorder 1, %s21
      %p237 = scmp.lt.s32.totalorder %s21, 3
      %p238 = pnand %p236, %p237
      %p239 = pneg %p238
      // Predicated region
      $region9: #{tpu_custom_call.1} parent=5 // pred_check
        _
      $region10: #{tpu_custom_call.1} parent=5 // pred_check_branch
        %241 = sbr.rel (%p238) target = $region12
      $region11: #{tpu_custom_call.1} parent=5 // pred_region
        %s242 = ssub.s32 %s21, 1
        // Predicated region
        $region13: #{tpu_custom_call.1} parent=11 // pred_check
          %p243 = pneg %p54
        $region14: #{tpu_custom_call.1} parent=11 // pred_check_branch
          %245 = sbr.rel (%p243) target = $region16
        $region15: #{tpu_custom_call.1} parent=11 // pred_region
          _
        $region16: #{tpu_custom_call.1} parent=11 // pred_fallthru
          _
      $region12: #{tpu_custom_call.1} parent=5 // pred_fallthru
        _
      %p246 = scmp.lt.s32.totalorder %s21, 2
      // Predicated region
      $region17: #{tpu_custom_call.1} parent=5 // pred_check
        %p247 = pneg %p246
      $region18: #{tpu_custom_call.1} parent=5 // pred_check_branch
        %249 = sbr.rel (%p247) target = $region20
      $region19: #{tpu_custom_call.1} parent=5 // pred_region
        // Predicated region
        $region21: #{tpu_custom_call.1} parent=19 // pred_check
          %p250 = pneg %p82
        $region22: #{tpu_custom_call.1} parent=19 // pred_check_branch
          %252 = sbr.rel (%p250) target = $region24
        $region23: #{tpu_custom_call.1} parent=19 // pred_region
          %s253 = sand.u32 %s72, 1
          %s254 = scalar_lea.sflag [#allocation5], %s253
          %s255 = sand.u32 %s72, 1
          %s256 = smul.addr %s255, 64
          %s257 = scalar_lea.vmem [#allocation4], %s256
          %s258 = smul.u32 %s29, 2
          %s259 = ssub.s32 0, %s258
          %s260 = smul.u32 %s28, %s259
          %s261 = sadd.s32 %s29, %s260
          %s262 = smul.u32 8, %s261
          %264 = vsyncadd %s254, 0
          %s265 = smul.addr %s262, 8
          %s266 = scalar_lea.hbm %s1, %s265
          %s267 = sshll.u32 %s266, 4
          %s268 = int_to_ptr.hbm [resolvable:$true] %s267
          %s269 = sshll.u32 %s257, 4
          %s270 = int_to_ptr.vmem [resolvable:$true] %s269
          %275 = dma.hbm_to_vmem [thread:$0]  %s268, 1024, %s270, %s254, 128, 128, 8
        $region24: #{tpu_custom_call.1} parent=19 // pred_fallthru
          _
        // Predicated region
        $region25: #{tpu_custom_call.1} parent=19 // pred_check
          %p276 = pneg %p108
        $region26: #{tpu_custom_call.1} parent=19 // pred_check_branch
          %278 = sbr.rel (%p276) target = $region28
        $region27: #{tpu_custom_call.1} parent=19 // pred_region
          %s279 = sand.u32 %s21, 1
          %s280 = scalar_lea.sflag [#allocation8], %s279
          %s281 = sand.u32 %s98, 1
          %s282 = smul.addr %s281, 48
          %s283 = scalar_lea.vmem [#allocation7], %s282
          %285 = vsyncadd %s280, 0
          %s286 = smul.addr %s28, 6
          %s287 = smul.addr %s286, 8
          %s288 = scalar_lea.hbm %s2, %s287
          %s289 = sshll.u32 %s288, 4
          %s290 = int_to_ptr.hbm [resolvable:$true] %s289
          %s291 = sshll.u32 %s283, 4
          %s292 = int_to_ptr.vmem [resolvable:$true] %s291
          %297 = dma.hbm_to_vmem [thread:$0]  %s290, 768, %s292, %s280, 384, 384, 24
        $region28: #{tpu_custom_call.1} parent=19 // pred_fallthru
          _
        // Predicated region
        $region29: #{tpu_custom_call.1} parent=19 // pred_check
          %p298 = pneg %p134
        $region30: #{tpu_custom_call.1} parent=19 // pred_check_branch
          %300 = sbr.rel (%p298) target = $region32
        $region31: #{tpu_custom_call.1} parent=19 // pred_region
          %s301 = sand.u32 %s21, 1
          %s302 = scalar_lea.sflag [#allocation8], %s301
          %s303 = sand.u32 %s124, 1
          %s304 = smul.addr %s303, 384
          %s305 = scalar_lea.vmem [#allocation9], %s304
          %307 = vsyncadd %s302, 0
          %s308 = smul.addr %s28, 48
          %s309 = smul.addr %s308, 8
          %s310 = scalar_lea.hbm %s3, %s309
          %s311 = sshll.u32 %s310, 4
          %s312 = int_to_ptr.hbm [resolvable:$true] %s311
          %s313 = sshll.u32 %s305, 4
          %s314 = int_to_ptr.vmem [resolvable:$true] %s313
          %319 = dma.hbm_to_vmem [thread:$0]  %s312, 6144, %s314, %s302, 384, 384, 24
        $region32: #{tpu_custom_call.1} parent=19 // pred_fallthru
          _
        // Predicated region
        $region33: #{tpu_custom_call.1} parent=19 // pred_check
          %p320 = pneg %p160
        $region34: #{tpu_custom_call.1} parent=19 // pred_check_branch
          %322 = sbr.rel (%p320) target = $region36
        $region35: #{tpu_custom_call.1} parent=19 // pred_region
          %p323 = scmp.lt.s32.totalorder %s28, 1
          %s324 = scalar_select %p323, %s28, 1
          %s325 = smul.addr %s324, 3
          %s326 = scalar_lea.vmem %s4, %s325
        $region36: #{tpu_custom_call.1} parent=19 // pred_fallthru
          _
        // Predicated region
        $region37: #{tpu_custom_call.1} parent=19 // pred_check
          %p327 = pneg %p186
        $region38: #{tpu_custom_call.1} parent=19 // pred_check_branch
          %329 = sbr.rel (%p327) target = $region40
        $region39: #{tpu_custom_call.1} parent=19 // pred_region
          %p330 = scmp.lt.s32.totalorder %s28, 1
          %s331 = scalar_select %p330, %s28, 1
          %s332 = scalar_lea.vmem %s5, %s331
        $region40: #{tpu_custom_call.1} parent=19 // pred_fallthru
          _
      $region20: #{tpu_custom_call.1} parent=5 // pred_fallthru
        _
      %p333 = scmp.le.s32.totalorder 1, %s21
      %p334 = scmp.lt.s32.totalorder %s21, 3
      %p335 = pnand %p333, %p334
      %p336 = pneg %p335
      // Predicated region
      $region41: #{tpu_custom_call.1} parent=5 // pred_check
        _
      $region42: #{tpu_custom_call.1} parent=5 // pred_check_branch
        %338 = sbr.rel (%p335) target = $region44
      $region43: #{tpu_custom_call.1} parent=5 // pred_region
        %s339 = ssub.s32 %s21, 1
        %s340 = sand.u32 %s75, 1
        %s341 = scalar_lea.sflag [#allocation5], %s340
        %s342 = sand.u32 %s75, 1
        %s343 = smul.addr %s342, 64
        %s344 = scalar_lea.vmem [#allocation4], %s343
        // Predicated region
        $region45: #{tpu_custom_call.1} parent=43 // pred_check
          %p345 = pneg %p88
        $region46: #{tpu_custom_call.1} parent=43 // pred_check_branch
          %347 = sbr.rel (%p345) target = $region48
        $region47: #{tpu_custom_call.1} parent=43 // pred_region
          %349 = dma.done %s341, 1024
        $region48: #{tpu_custom_call.1} parent=43 // pred_fallthru
          _
        %s350 = sand.u32 %s26, 1
        %s351 = scalar_lea.sflag [#allocation8], %s350
        %s352 = sand.u32 %s101, 1
        %s353 = smul.addr %s352, 48
        %s354 = scalar_lea.vmem [#allocation7], %s353
        // Predicated region
        $region49: #{tpu_custom_call.1} parent=43 // pred_check
          %p355 = pneg %p114
        $region50: #{tpu_custom_call.1} parent=43 // pred_check_branch
          %357 = sbr.rel (%p355) target = $region52
        $region51: #{tpu_custom_call.1} parent=43 // pred_region
          %359 = dma.done %s351, 768
        $region52: #{tpu_custom_call.1} parent=43 // pred_fallthru
          _
        %s360 = sand.u32 %s26, 1
        %s361 = scalar_lea.sflag [#allocation8], %s360
        %s362 = sand.u32 %s127, 1
        %s363 = smul.addr %s362, 384
        %s364 = scalar_lea.vmem [#allocation9], %s363
        // Predicated region
        $region53: #{tpu_custom_call.1} parent=43 // pred_check
          %p365 = pneg %p140
        $region54: #{tpu_custom_call.1} parent=43 // pred_check_branch
          %367 = sbr.rel (%p365) target = $region56
        $region55: #{tpu_custom_call.1} parent=43 // pred_region
          %369 = dma.done %s361, 6144
        $region56: #{tpu_custom_call.1} parent=43 // pred_fallthru
          _
        %p370 = pneg %p54
        %p371 = pneg %p51
        %s372 = sand.u32 %s75, 1
        %s373 = scalar_lea.sflag [#allocation5], %s372
        %s374 = sand.u32 %s75, 1
        %s375 = smul.addr %s374, 64
        %s376 = scalar_lea.vmem [#allocation4], %s375
        %p377 = pneg %p88
        %p378 = pneg %p85
        %s379 = sand.u32 %s26, 1
        %s380 = scalar_lea.sflag [#allocation8], %s379
        %s381 = sand.u32 %s101, 1
        %s382 = smul.addr %s381, 48
        %s383 = scalar_lea.vmem [#allocation7], %s382
        %p384 = pneg %p114
        %p385 = pneg %p111
        %s386 = sand.u32 %s26, 1
        %s387 = scalar_lea.sflag [#allocation8], %s386
        %s388 = sand.u32 %s127, 1
        %s389 = smul.addr %s388, 384
        %s390 = scalar_lea.vmem [#allocation9], %s389
        %p391 = pneg %p140
        %p392 = pneg %p137
        %p393 = scmp.lt.s32.totalorder %s30, 1
        %s394 = scalar_select %p393, %s30, 1
        %s395 = smul.addr %s394, 3
        %s396 = scalar_lea.vmem %s4, %s395
        %p397 = pneg %p166
        %p398 = pneg %p163
        %p399 = scmp.lt.s32.totalorder %s30, 1
        %s400 = scalar_select %p399, %s30, 1
        %s401 = scalar_lea.vmem %s5, %s400
        %p402 = pneg %p192
        %p403 = pneg %p189
        %p404 = pneg %p228
        %p405 = pneg %p225
        %s406 = sand.u32 %s215, 1
        %s407 = scalar_lea.sflag [#allocation6], %s406
        %s408 = sand.u32 %s215, 1
        %s409 = smul.addr %s408, 64
        %s410 = scalar_lea.vmem [#allocation10], %s409
        %s411 = smul.u32 %s31, 2
        %s412 = ssub.s32 0, %s411
        %s413 = smul.u32 %s30, %s412
        %s414 = sadd.s32 %s31, %s413
        %s415 = smul.u32 8, %s414
        %p416 = scmp.lt.s32.totalorder %s30, 1
        %s417 = scalar_select %p416, %s30, 1
        %s418 = smul.addr %s417, 3
        %s419 = scalar_lea.vmem %s4, %s418
        %p420 = scmp.lt.s32.totalorder %s30, 1
        %s421 = scalar_select %p420, %s30, 1
        %s422 = scalar_lea.vmem %s5, %s421
        %s423 = smul.u32 %s31, 2
        %s424 = ssub.s32 0, %s423
        %s425 = smul.u32 %s30, %s424
        %s426 = sadd.s32 %s31, %s425
        %s427 = smul.u32 8, %s426
        %p428 = scmp.eq.s32.totalorder %s31, 0
        // Predicated region
        $region57: #{tpu_custom_call.1} parent=43 // pred_check
          %p429 = pneg %p428
        $region58: #{tpu_custom_call.1} parent=43 // pred_check_branch
          %431 = sbr.rel (%p429) target = $region60
        $region59: #{tpu_custom_call.1} parent=43 // pred_region
          %432 = vst [vmem:[#allocation2] sm:$0xff] 0.0
        $region60: #{tpu_custom_call.1} parent=43 // pred_fallthru
          _
        %v433 = vld [vmem:[%s344] sm:$0xff]
        %v434 = vld [vmem:[%s344 + $0x8] sm:$0xff]
        %v435 = vld [vmem:[%s344 + $0x10] sm:$0xff]
        %v436 = vld [vmem:[%s344 + $0x18] sm:$0xff]
        %v437 = vld [vmem:[%s344 + $0x20] sm:$0xff]
        %v438 = vld [vmem:[%s344 + $0x28] sm:$0xff]
        %v439 = vld [vmem:[%s344 + $0x30] sm:$0xff]
        %v440 = vld [vmem:[%s344 + $0x38] sm:$0xff]
        %v441 = vld [vmem:[%s354] sm:$0xff]
        %v442 = vld [vmem:[%s354 + $0x8] sm:$0xff]
        %v443 = vld [vmem:[%s354 + $0x10] sm:$0xff]
        %v444 = vld [vmem:[%s354 + $0x18] sm:$0xff]
        %v445 = vld [vmem:[%s354 + $0x20] sm:$0xff]
        %v446 = vld [vmem:[%s354 + $0x28] sm:$0xff]
        %v447 = vld [vmem:[%s419] sm:$0x7]
        %v449 = vperm.slane %v447, 0
        %v450 = vperm.slane %v447, 1
        %v451 = vperm.slane %v447, 2
        %vm455 = vcmask 130048
        %v457 = vsel %vm455, %v433, 0
        %v460 = vsel %vm455, %v434, 0
        %v463 = vsel %vm455, %v435, 0
        %v466 = vsel %vm455, %v436, 0
        %v469 = vsel %vm455, %v437, 0
        %v472 = vsel %vm455, %v438, 0
        %v475 = vsel %vm455, %v439, 0
        %v478 = vsel %vm455, %v440, 0
        %480 = vmatpush.msra.mxu0 0.0
        %481 = vmatpush.msra.mxu0 0.0
        %482 = vmatpush.msra.mxu0 0.0
        %483 = vmatpush.msra.mxu0 0.0
        %484 = vmatpush.msra.mxu0 0.0
        %485 = vmatpush.msra.mxu0 0.0
        %486 = vmatpush.msra.mxu0 0.0
        %487 = vmatpush.msra.mxu0 0.0
        %488 = vmatpush.msra.mxu0 0.0
        %489 = vmatpush.msra.mxu0 0.0
        %490 = vmatpush.msra.mxu0 0.0
        %491 = vmatpush.msra.mxu0 0.0
        %492 = vmatpush.msra.mxu0 0.0
        %493 = vmatpush.msra.mxu0 0.0
        %494 = vmatpush.msra.mxu0 %v444
        %495 = vmatpush.msra.mxu0 %v441
        %496 = vmatmul.f32.gmra.mxu0 %v457
        %v497 = vpop.f32.mrf.mxu0
        %v498 = vadd.f32 %v449, %v497
        %499 = vmatmul.f32.gmra.mxu0 %v460
        %v500 = vpop.f32.mrf.mxu0
        %v501 = vadd.f32 %v449, %v500
        %502 = vmatmul.f32.gmra.mxu0 %v463
        %v503 = vpop.f32.mrf.mxu0
        %v504 = vadd.f32 %v449, %v503
        %505 = vmatmul.f32.gmra.mxu0 %v466
        %v506 = vpop.f32.mrf.mxu0
        %v507 = vadd.f32 %v449, %v506
        %508 = vmatmul.f32.gmra.mxu0 %v469
        %v509 = vpop.f32.mrf.mxu0
        %v510 = vadd.f32 %v449, %v509
        %511 = vmatmul.f32.gmra.mxu0 %v472
        %v512 = vpop.f32.mrf.mxu0
        %v513 = vadd.f32 %v449, %v512
        %514 = vmatmul.f32.gmra.mxu0 %v475
        %v515 = vpop.f32.mrf.mxu0
        %v516 = vadd.f32 %v449, %v515
        %517 = vmatmul.f32.gmra.mxu0 %v478
        %v518 = vpop.f32.mrf.mxu0
        %v519 = vadd.f32 %v449, %v518
        %520 = vdwg.mxu0
        %521 = vmatpush.msra.mxu0 0.0
        %522 = vmatpush.msra.mxu0 0.0
        %523 = vmatpush.msra.mxu0 0.0
        %524 = vmatpush.msra.mxu0 0.0
        %525 = vmatpush.msra.mxu0 0.0
        %526 = vmatpush.msra.mxu0 0.0
        %527 = vmatpush.msra.mxu0 0.0
        %528 = vmatpush.msra.mxu0 0.0
        %529 = vmatpush.msra.mxu0 0.0
        %530 = vmatpush.msra.mxu0 0.0
        %531 = vmatpush.msra.mxu0 0.0
        %532 = vmatpush.msra.mxu0 0.0
        %533 = vmatpush.msra.mxu0 0.0
        %534 = vmatpush.msra.mxu0 0.0
        %535 = vmatpush.msra.mxu0 %v445
        %536 = vmatpush.msra.mxu0 %v442
        %537 = vmatmul.f32.gmra.mxu0 %v457
        %v538 = vpop.f32.mrf.mxu0
        %v539 = vadd.f32 %v450, %v538
        %540 = vmatmul.f32.gmra.mxu0 %v460
        %v541 = vpop.f32.mrf.mxu0
        %v542 = vadd.f32 %v450, %v541
        %543 = vmatmul.f32.gmra.mxu0 %v463
        %v544 = vpop.f32.mrf.mxu0
        %v545 = vadd.f32 %v450, %v544
        %546 = vmatmul.f32.gmra.mxu0 %v466
        %v547 = vpop.f32.mrf.mxu0
        %v548 = vadd.f32 %v450, %v547
        %549 = vmatmul.f32.gmra.mxu0 %v469
        %v550 = vpop.f32.mrf.mxu0
        %v551 = vadd.f32 %v450, %v550
        %552 = vmatmul.f32.gmra.mxu0 %v472
        %v553 = vpop.f32.mrf.mxu0
        %v554 = vadd.f32 %v450, %v553
        %555 = vmatmul.f32.gmra.mxu0 %v475
        %v556 = vpop.f32.mrf.mxu0
        %v557 = vadd.f32 %v450, %v556
        %558 = vmatmul.f32.gmra.mxu0 %v478
        %v559 = vpop.f32.mrf.mxu0
        %v560 = vadd.f32 %v450, %v559
        %561 = vdwg.mxu0
        %562 = vmatpush.msra.mxu0 0.0
        %563 = vmatpush.msra.mxu0 0.0
        %564 = vmatpush.msra.mxu0 0.0
        %565 = vmatpush.msra.mxu0 0.0
        %566 = vmatpush.msra.mxu0 0.0
        %567 = vmatpush.msra.mxu0 0.0
        %568 = vmatpush.msra.mxu0 0.0
        %569 = vmatpush.msra.mxu0 0.0
        %570 = vmatpush.msra.mxu0 0.0
        %571 = vmatpush.msra.mxu0 0.0
        %572 = vmatpush.msra.mxu0 0.0
        %573 = vmatpush.msra.mxu0 0.0
        %574 = vmatpush.msra.mxu0 0.0
        %575 = vmatpush.msra.mxu0 0.0
        %576 = vmatpush.msra.mxu0 %v446
        %577 = vmatpush.msra.mxu0 %v443
        %578 = vmatmul.f32.gmra.mxu0 %v457
        %v579 = vpop.f32.mrf.mxu0
        %v580 = vadd.f32 %v451, %v579
        %581 = vmatmul.f32.gmra.mxu0 %v460
        %v582 = vpop.f32.mrf.mxu0
        %v583 = vadd.f32 %v451, %v582
        %584 = vmatmul.f32.gmra.mxu0 %v463
        %v585 = vpop.f32.mrf.mxu0
        %v586 = vadd.f32 %v451, %v585
        %587 = vmatmul.f32.gmra.mxu0 %v466
        %v588 = vpop.f32.mrf.mxu0
        %v589 = vadd.f32 %v451, %v588
        %590 = vmatmul.f32.gmra.mxu0 %v469
        %v591 = vpop.f32.mrf.mxu0
        %v592 = vadd.f32 %v451, %v591
        %593 = vmatmul.f32.gmra.mxu0 %v472
        %v594 = vpop.f32.mrf.mxu0
        %v595 = vadd.f32 %v451, %v594
        %596 = vmatmul.f32.gmra.mxu0 %v475
        %v597 = vpop.f32.mrf.mxu0
        %v598 = vadd.f32 %v451, %v597
        %599 = vmatmul.f32.gmra.mxu0 %v478
        %v600 = vpop.f32.mrf.mxu0
        %v601 = vadd.f32 %v451, %v600
        %602 = vdwg.mxu0
        %603 = vst [vmem:[#allocation3] sm:$0xff] %v498
        %604 = vst [vmem:[#allocation3 + $0x8] sm:$0xff] %v539
        %605 = vst [vmem:[#allocation3 + $0x10] sm:$0xff] %v580
        %606 = vst [vmem:[#allocation3 + $0x18] sm:$0xff] %v501
        %607 = vst [vmem:[#allocation3 + $0x20] sm:$0xff] %v542
        %608 = vst [vmem:[#allocation3 + $0x28] sm:$0xff] %v583
        %609 = vst [vmem:[#allocation3 + $0x30] sm:$0xff] %v504
        %610 = vst [vmem:[#allocation3 + $0x38] sm:$0xff] %v545
        %611 = vst [vmem:[#allocation3 + $0x40] sm:$0xff] %v586
        %612 = vst [vmem:[#allocation3 + $0x48] sm:$0xff] %v507
        %613 = vst [vmem:[#allocation3 + $0x50] sm:$0xff] %v548
        %614 = vst [vmem:[#allocation3 + $0x58] sm:$0xff] %v589
        %615 = vst [vmem:[#allocation3 + $0x60] sm:$0xff] %v510
        %616 = vst [vmem:[#allocation3 + $0x68] sm:$0xff] %v551
        %617 = vst [vmem:[#allocation3 + $0x70] sm:$0xff] %v592
        %618 = vst [vmem:[#allocation3 + $0x78] sm:$0xff] %v513
        %619 = vst [vmem:[#allocation3 + $0x80] sm:$0xff] %v554
        %620 = vst [vmem:[#allocation3 + $0x88] sm:$0xff] %v595
        %621 = vst [vmem:[#allocation3 + $0x90] sm:$0xff] %v516
        %622 = vst [vmem:[#allocation3 + $0x98] sm:$0xff] %v557
        %623 = vst [vmem:[#allocation3 + $0xa0] sm:$0xff] %v598
        %624 = vst [vmem:[#allocation3 + $0xa8] sm:$0xff] %v519
        %625 = vst [vmem:[#allocation3 + $0xb0] sm:$0xff] %v560
        %626 = vst [vmem:[#allocation3 + $0xb8] sm:$0xff] %v601
        %v627 = vld [vmem:[%s0] sm:$0xff]
        %v628 = vld [vmem:[%s422] sm:$0x1]
        %v630 = vperm.slane %v628, 0
        %v632 = vld [vmem:[%s364] sm:$0xff]
        %v633 = vld [vmem:[%s364 + $0x8] sm:$0xff]
        %v634 = vld [vmem:[%s364 + $0x10] sm:$0xff]
        %v635 = vld [vmem:[%s364 + $0x18] sm:$0xff]
        %v636 = vld [vmem:[%s364 + $0x20] sm:$0xff]
        %v637 = vld [vmem:[%s364 + $0x28] sm:$0xff]
        %v638 = vld [vmem:[%s364 + $0x30] sm:$0xff]
        %v639 = vld [vmem:[%s364 + $0x38] sm:$0xff]
        %v640 = vld [vmem:[%s364 + $0x40] sm:$0xff]
        %v641 = vld [vmem:[%s364 + $0x48] sm:$0xff]
        %v642 = vld [vmem:[%s364 + $0x50] sm:$0xff]
        %v643 = vld [vmem:[%s364 + $0x58] sm:$0xff]
        %v644 = vld [vmem:[%s364 + $0x60] sm:$0xff]
        %v645 = vld [vmem:[%s364 + $0x68] sm:$0xff]
        %v646 = vld [vmem:[%s364 + $0x70] sm:$0xff]
        %v647 = vld [vmem:[%s364 + $0x78] sm:$0xff]
        %v648 = vld [vmem:[%s364 + $0x80] sm:$0xff]
        %v649 = vld [vmem:[%s364 + $0x88] sm:$0xff]
        %v650 = vld [vmem:[%s364 + $0x90] sm:$0xff]
        %v651 = vld [vmem:[%s364 + $0x98] sm:$0xff]
        %v652 = vld [vmem:[%s364 + $0xa0] sm:$0xff]
        %v653 = vld [vmem:[%s364 + $0xa8] sm:$0xff]
        %v654 = vld [vmem:[%s364 + $0xb0] sm:$0xff]
        %v655 = vld [vmem:[%s364 + $0xb8] sm:$0xff]
        %v656 = vld [vmem:[%s364 + $0xc0] sm:$0xff]
        %v657 = vld [vmem:[%s364 + $0xc8] sm:$0xff]
        %v658 = vld [vmem:[%s364 + $0xd0] sm:$0xff]
        %v659 = vld [vmem:[%s364 + $0xd8] sm:$0xff]
        %v660 = vld [vmem:[%s364 + $0xe0] sm:$0xff]
        %v661 = vld [vmem:[%s364 + $0xe8] sm:$0xff]
        %v662 = vld [vmem:[%s364 + $0xf0] sm:$0xff]
        %v663 = vld [vmem:[%s364 + $0xf8] sm:$0xff]
        %v664 = vld [vmem:[%s364 + $0x100] sm:$0xff]
        %v665 = vld [vmem:[%s364 + $0x108] sm:$0xff]
        %v666 = vld [vmem:[%s364 + $0x110] sm:$0xff]
        %v667 = vld [vmem:[%s364 + $0x118] sm:$0xff]
        %v668 = vld [vmem:[%s364 + $0x120] sm:$0xff]
        %v669 = vld [vmem:[%s364 + $0x128] sm:$0xff]
        %v670 = vld [vmem:[%s364 + $0x130] sm:$0xff]
        %v671 = vld [vmem:[%s364 + $0x138] sm:$0xff]
        %v672 = vld [vmem:[%s364 + $0x140] sm:$0xff]
        %v673 = vld [vmem:[%s364 + $0x148] sm:$0xff]
        %v674 = vld [vmem:[%s364 + $0x150] sm:$0xff]
        %v675 = vld [vmem:[%s364 + $0x158] sm:$0xff]
        %v676 = vld [vmem:[%s364 + $0x160] sm:$0xff]
        %v677 = vld [vmem:[%s364 + $0x168] sm:$0xff]
        %v678 = vld [vmem:[%s364 + $0x170] sm:$0xff]
        %v679 = vld [vmem:[%s364 + $0x178] sm:$0xff]
        %s680 = smul.u32 %s31, 2
        %s681 = ssub.s32 0, %s680
        %s682 = smul.u32 %s30, %s681
        %s683 = sadd.s32 %s31, %s682
        %s684 = smul.u32 %s683, 8
        %s685 = smul.u32 %s30, 7
        %s686 = sadd.s32 %s684, %s685
        %v687 = vld [vmem:[#allocation2] sm:$0xff]
        %s688 = smul.u32 %s685, 3
        %s689 = smul.addr %s688, 8
        %s690 = scalar_lea.vmem [#allocation3], %s689
        %v691 = vld [vmem:[%s690] sm:$0xff]
        %v692 = vld [vmem:[%s690 + $0x8] sm:$0xff]
        %v693 = vld [vmem:[%s690 + $0x10] sm:$0xff]
        %694 = vmatpush.msra.mxu0 %v677
        %695 = vmatpush.msra.mxu0 %v674
        %696 = vmatpush.msra.mxu0 %v671
        %697 = vmatpush.msra.mxu0 %v668
        %698 = vmatpush.msra.mxu0 %v665
        %699 = vmatpush.msra.mxu0 %v662
        %700 = vmatpush.msra.mxu0 %v659
        %701 = vmatpush.msra.mxu0 %v656
        %702 = vmatpush.msra.mxu0 %v653
        %703 = vmatpush.msra.mxu0 %v650
        %704 = vmatpush.msra.mxu0 %v647
        %705 = vmatpush.msra.mxu0 %v644
        %706 = vmatpush.msra.mxu0 %v641
        %707 = vmatpush.msra.mxu0 %v638
        %708 = vmatpush.msra.mxu0 %v635
        %709 = vmatpush.msra.mxu0 %v632
        %710 = vmatmul.f32.gmra.mxu0 %v687
        %v711 = vpop.f32.mrf.mxu0
        %v712 = vadd.f32 0.0, %v711
        %713 = vdwg.mxu0
        %714 = vmatpush.msra.mxu0 %v678
        %715 = vmatpush.msra.mxu0 %v675
        %716 = vmatpush.msra.mxu0 %v672
        %717 = vmatpush.msra.mxu0 %v669
        %718 = vmatpush.msra.mxu0 %v666
        %719 = vmatpush.msra.mxu0 %v663
        %720 = vmatpush.msra.mxu0 %v660
        %721 = vmatpush.msra.mxu0 %v657
        %722 = vmatpush.msra.mxu0 %v654
        %723 = vmatpush.msra.mxu0 %v651
        %724 = vmatpush.msra.mxu0 %v648
        %725 = vmatpush.msra.mxu0 %v645
        %726 = vmatpush.msra.mxu0 %v642
        %727 = vmatpush.msra.mxu0 %v639
        %728 = vmatpush.msra.mxu0 %v636
        %729 = vmatpush.msra.mxu0 %v633
        %730 = vmatmul.f32.gmra.mxu0 %v687
        %v731 = vpop.f32.mrf.mxu0
        %v732 = vadd.f32 0.0, %v731
        %733 = vdwg.mxu0
        %734 = vmatpush.msra.mxu0 %v679
        %735 = vmatpush.msra.mxu0 %v676
        %736 = vmatpush.msra.mxu0 %v673
        %737 = vmatpush.msra.mxu0 %v670
        %738 = vmatpush.msra.mxu0 %v667
        %739 = vmatpush.msra.mxu0 %v664
        %740 = vmatpush.msra.mxu0 %v661
        %741 = vmatpush.msra.mxu0 %v658
        %742 = vmatpush.msra.mxu0 %v655
        %743 = vmatpush.msra.mxu0 %v652
        %744 = vmatpush.msra.mxu0 %v649
        %745 = vmatpush.msra.mxu0 %v646
        %746 = vmatpush.msra.mxu0 %v643
        %747 = vmatpush.msra.mxu0 %v640
        %748 = vmatpush.msra.mxu0 %v637
        %749 = vmatpush.msra.mxu0 %v634
        %750 = vmatmul.f32.gmra.mxu0 %v687
        %v751 = vpop.f32.mrf.mxu0
        %v752 = vadd.f32 0.0, %v751
        %753 = vdwg.mxu0
        %v754 = vadd.f32 %v691, %v712
        %v755 = vxor.u32 %v754, 2147483648
        %v756 = vmul.f32 %v755, 1.442695
        %v757 = vpow.pop %v756
        %v758 = vadd.f32 %v757, 1.0
        %v759 = vrcp.pop %v758
        %v760 = vmul.f32 %v758, %v759
        %v761 = vsub.f32 1.0, %v760
        %v762 = vmul.f32 %v759, %v761
        %v763 = vadd.f32 %v759, %v762
        %vm764 = vweird.f32 %v758
        %vm765 = vweird.f32 %v759
        %vm766 = vmor %vm764, %vm765
        %v767 = vsel %vm766, %v759, %v763
        %v768 = vand.u32 2147483647, %v758
        %vm769 = vcmp.eq.f32.partialorder %v768, 8.507059e+37
        %v770 = vand.u32 %v758, 2147483648
        %v771 = vor.u32 1.1754944e-38, %v770
        %v772 = vsel %vm769, %v771, %v767
        %v773 = vmul.f32 1.0, %v772
        %v774 = vadd.f32 %v692, %v732
        %v775 = vxor.u32 %v774, 2147483648
        %v776 = vmul.f32 %v775, 1.442695
        %v777 = vpow.pop %v776
        %v778 = vadd.f32 %v777, 1.0
        %v779 = vrcp.pop %v778
        %v780 = vmul.f32 %v778, %v779
        %v781 = vsub.f32 1.0, %v780
        %v782 = vmul.f32 %v779, %v781
        %v783 = vadd.f32 %v779, %v782
        %vm784 = vweird.f32 %v778
        %vm785 = vweird.f32 %v779
        %vm786 = vmor %vm784, %vm785
        %v787 = vsel %vm786, %v779, %v783
        %v788 = vand.u32 2147483647, %v778
        %vm789 = vcmp.eq.f32.partialorder %v788, 8.507059e+37
        %v790 = vand.u32 %v778, 2147483648
        %v791 = vor.u32 1.1754944e-38, %v790
        %v792 = vsel %vm789, %v791, %v787
        %v793 = vmul.f32 1.0, %v792
        %v794 = vadd.f32 %v752, %v630
        %v795 = vmul.f32 %v773, %v794
        %v796 = vadd.f32 %v693, %v795
        %v797 = vtanh.pop %v796
        %v798 = vsub.f32 1.0, %v793
        %v799 = vmul.f32 %v798, %v797
        %v800 = vmul.f32 %v793, %v687
        %v801 = vadd.f32 %v799, %v800
        %v802 = vstv %s686
        %vm803 = vcmp.lt.s32.totalorder %v802, %v627
        %v804 = vsel %vm803, 1, 0
        %805 = vset.pattern.permute.xlu0 0
        %806 = vperm.xlu0 %805, %v804
        %v807 = vpop.permute.xlu0 %806
        %vm808 = vcmp.eq.s32.totalorder %v807, 1
        %v809 = vsel %vm808, %v801, %v687
        %810 = vst [vmem:[#allocation2] sm:$0xff] %v809
        %v811 = vsel %vm808, %v801, 0.0
        %s812 = smul.u32 %s685, 8
        %s813 = scalar_lea.vmem %s410, %s812 [#allocation10]
        %814 = vst [vmem:[%s813] sm:$0xff] %v811
        %s815 = smul.u32 %s30, 5
        %s816 = sadd.s32 %s815, 1
        %s817 = sadd.s32 %s684, %s816
        %v818 = vld [vmem:[#allocation2] sm:$0xff]
        %s819 = smul.u32 %s816, 3
        %s820 = smul.addr %s819, 8
        %s821 = scalar_lea.vmem [#allocation3], %s820
        %v822 = vld [vmem:[%s821] sm:$0xff]
        %v823 = vld [vmem:[%s821 + $0x8] sm:$0xff]
        %v824 = vld [vmem:[%s821 + $0x10] sm:$0xff]
        %825 = vmatpush.msra.mxu0 %v677
        %826 = vmatpush.msra.mxu0 %v674
        %827 = vmatpush.msra.mxu0 %v671
        %828 = vmatpush.msra.mxu0 %v668
        %829 = vmatpush.msra.mxu0 %v665
        %830 = vmatpush.msra.mxu0 %v662
        %831 = vmatpush.msra.mxu0 %v659
        %832 = vmatpush.msra.mxu0 %v656
        %833 = vmatpush.msra.mxu0 %v653
        %834 = vmatpush.msra.mxu0 %v650
        %835 = vmatpush.msra.mxu0 %v647
        %836 = vmatpush.msra.mxu0 %v644
        %837 = vmatpush.msra.mxu0 %v641
        %838 = vmatpush.msra.mxu0 %v638
        %839 = vmatpush.msra.mxu0 %v635
        %840 = vmatpush.msra.mxu0 %v632
        %841 = vmatmul.f32.gmra.mxu0 %v818
        %v842 = vpop.f32.mrf.mxu0
        %v843 = vadd.f32 0.0, %v842
        %844 = vdwg.mxu0
        %845 = vmatpush.msra.mxu0 %v678
        %846 = vmatpush.msra.mxu0 %v675
        %847 = vmatpush.msra.mxu0 %v672
        %848 = vmatpush.msra.mxu0 %v669
        %849 = vmatpush.msra.mxu0 %v666
        %850 = vmatpush.msra.mxu0 %v663
        %851 = vmatpush.msra.mxu0 %v660
        %852 = vmatpush.msra.mxu0 %v657
        %853 = vmatpush.msra.mxu0 %v654
        %854 = vmatpush.msra.mxu0 %v651
        %855 = vmatpush.msra.mxu0 %v648
        %856 = vmatpush.msra.mxu0 %v645
        %857 = vmatpush.msra.mxu0 %v642
        %858 = vmatpush.msra.mxu0 %v639
        %859 = vmatpush.msra.mxu0 %v636
        %860 = vmatpush.msra.mxu0 %v633
        %861 = vmatmul.f32.gmra.mxu0 %v818
        %v862 = vpop.f32.mrf.mxu0
        %v863 = vadd.f32 0.0, %v862
        %864 = vdwg.mxu0
        %865 = vmatpush.msra.mxu0 %v679
        %866 = vmatpush.msra.mxu0 %v676
        %867 = vmatpush.msra.mxu0 %v673
        %868 = vmatpush.msra.mxu0 %v670
        %869 = vmatpush.msra.mxu0 %v667
        %870 = vmatpush.msra.mxu0 %v664
        %871 = vmatpush.msra.mxu0 %v661
        %872 = vmatpush.msra.mxu0 %v658
        %873 = vmatpush.msra.mxu0 %v655
        %874 = vmatpush.msra.mxu0 %v652
        %875 = vmatpush.msra.mxu0 %v649
        %876 = vmatpush.msra.mxu0 %v646
        %877 = vmatpush.msra.mxu0 %v643
        %878 = vmatpush.msra.mxu0 %v640
        %879 = vmatpush.msra.mxu0 %v637
        %880 = vmatpush.msra.mxu0 %v634
        %881 = vmatmul.f32.gmra.mxu0 %v818
        %v882 = vpop.f32.mrf.mxu0
        %v883 = vadd.f32 0.0, %v882
        %884 = vdwg.mxu0
        %v885 = vadd.f32 %v822, %v843
        %v886 = vxor.u32 %v885, 2147483648
        %v887 = vmul.f32 %v886, 1.442695
        %v888 = vpow.pop %v887
        %v889 = vadd.f32 %v888, 1.0
        %v890 = vrcp.pop %v889
        %v891 = vmul.f32 %v889, %v890
        %v892 = vsub.f32 1.0, %v891
        %v893 = vmul.f32 %v890, %v892
        %v894 = vadd.f32 %v890, %v893
        %vm895 = vweird.f32 %v889
        %vm896 = vweird.f32 %v890
        %vm897 = vmor %vm895, %vm896
        %v898 = vsel %vm897, %v890, %v894
        %v899 = vand.u32 2147483647, %v889
        %vm900 = vcmp.eq.f32.partialorder %v899, 8.507059e+37
        %v901 = vand.u32 %v889, 2147483648
        %v902 = vor.u32 1.1754944e-38, %v901
        %v903 = vsel %vm900, %v902, %v898
        %v904 = vmul.f32 1.0, %v903
        %v905 = vadd.f32 %v823, %v863
        %v906 = vxor.u32 %v905, 2147483648
        %v907 = vmul.f32 %v906, 1.442695
        %v908 = vpow.pop %v907
        %v909 = vadd.f32 %v908, 1.0
        %v910 = vrcp.pop %v909
        %v911 = vmul.f32 %v909, %v910
        %v912 = vsub.f32 1.0, %v911
        %v913 = vmul.f32 %v910, %v912
        %v914 = vadd.f32 %v910, %v913
        %vm915 = vweird.f32 %v909
        %vm916 = vweird.f32 %v910
        %vm917 = vmor %vm915, %vm916
        %v918 = vsel %vm917, %v910, %v914
        %v919 = vand.u32 2147483647, %v909
        %vm920 = vcmp.eq.f32.partialorder %v919, 8.507059e+37
        %v921 = vand.u32 %v909, 2147483648
        %v922 = vor.u32 1.1754944e-38, %v921
        %v923 = vsel %vm920, %v922, %v918
        %v924 = vmul.f32 1.0, %v923
        %v925 = vadd.f32 %v883, %v630
        %v926 = vmul.f32 %v904, %v925
        %v927 = vadd.f32 %v824, %v926
        %v928 = vtanh.pop %v927
        %v929 = vsub.f32 1.0, %v924
        %v930 = vmul.f32 %v929, %v928
        %v931 = vmul.f32 %v924, %v818
        %v932 = vadd.f32 %v930, %v931
        %v933 = vstv %s817
        %vm934 = vcmp.lt.s32.totalorder %v933, %v627
        %v935 = vsel %vm934, 1, 0
        %936 = vset.pattern.permute.xlu0 0
        %937 = vperm.xlu0 %936, %v935
        %v938 = vpop.permute.xlu0 %937
        %vm939 = vcmp.eq.s32.totalorder %v938, 1
        %v940 = vsel %vm939, %v932, %v818
        %941 = vst [vmem:[#allocation2] sm:$0xff] %v940
        %v942 = vsel %vm939, %v932, 0.0
        %s943 = smul.u32 %s816, 8
        %s944 = scalar_lea.vmem %s410, %s943 [#allocation10]
        %945 = vst [vmem:[%s944] sm:$0xff] %v942
        %s946 = smul.u32 %s30, 3
        %s947 = sadd.s32 %s946, 2
        %s948 = sadd.s32 %s684, %s947
        %v949 = vld [vmem:[#allocation2] sm:$0xff]
        %s950 = smul.u32 %s947, 3
        %s951 = smul.addr %s950, 8
        %s952 = scalar_lea.vmem [#allocation3], %s951
        %v953 = vld [vmem:[%s952] sm:$0xff]
        %v954 = vld [vmem:[%s952 + $0x8] sm:$0xff]
        %v955 = vld [vmem:[%s952 + $0x10] sm:$0xff]
        %956 = vmatpush.msra.mxu0 %v677
        %957 = vmatpush.msra.mxu0 %v674
        %958 = vmatpush.msra.mxu0 %v671
        %959 = vmatpush.msra.mxu0 %v668
        %960 = vmatpush.msra.mxu0 %v665
        %961 = vmatpush.msra.mxu0 %v662
        %962 = vmatpush.msra.mxu0 %v659
        %963 = vmatpush.msra.mxu0 %v656
        %964 = vmatpush.msra.mxu0 %v653
        %965 = vmatpush.msra.mxu0 %v650
        %966 = vmatpush.msra.mxu0 %v647
        %967 = vmatpush.msra.mxu0 %v644
        %968 = vmatpush.msra.mxu0 %v641
        %969 = vmatpush.msra.mxu0 %v638
        %970 = vmatpush.msra.mxu0 %v635
        %971 = vmatpush.msra.mxu0 %v632
        %972 = vmatmul.f32.gmra.mxu0 %v949
        %v973 = vpop.f32.mrf.mxu0
        %v974 = vadd.f32 0.0, %v973
        %975 = vdwg.mxu0
        %976 = vmatpush.msra.mxu0 %v678
        %977 = vmatpush.msra.mxu0 %v675
        %978 = vmatpush.msra.mxu0 %v672
        %979 = vmatpush.msra.mxu0 %v669
        %980 = vmatpush.msra.mxu0 %v666
        %981 = vmatpush.msra.mxu0 %v663
        %982 = vmatpush.msra.mxu0 %v660
        %983 = vmatpush.msra.mxu0 %v657
        %984 = vmatpush.msra.mxu0 %v654
        %985 = vmatpush.msra.mxu0 %v651
        %986 = vmatpush.msra.mxu0 %v648
        %987 = vmatpush.msra.mxu0 %v645
        %988 = vmatpush.msra.mxu0 %v642
        %989 = vmatpush.msra.mxu0 %v639
        %990 = vmatpush.msra.mxu0 %v636
        %991 = vmatpush.msra.mxu0 %v633
        %992 = vmatmul.f32.gmra.mxu0 %v949
        %v993 = vpop.f32.mrf.mxu0
        %v994 = vadd.f32 0.0, %v993
        %995 = vdwg.mxu0
        %996 = vmatpush.msra.mxu0 %v679
        %997 = vmatpush.msra.mxu0 %v676
        %998 = vmatpush.msra.mxu0 %v673
        %999 = vmatpush.msra.mxu0 %v670
        %1000 = vmatpush.msra.mxu0 %v667
        %1001 = vmatpush.msra.mxu0 %v664
        %1002 = vmatpush.msra.mxu0 %v661
        %1003 = vmatpush.msra.mxu0 %v658
        %1004 = vmatpush.msra.mxu0 %v655
        %1005 = vmatpush.msra.mxu0 %v652
        %1006 = vmatpush.msra.mxu0 %v649
        %1007 = vmatpush.msra.mxu0 %v646
        %1008 = vmatpush.msra.mxu0 %v643
        %1009 = vmatpush.msra.mxu0 %v640
        %1010 = vmatpush.msra.mxu0 %v637
        %1011 = vmatpush.msra.mxu0 %v634
        %1012 = vmatmul.f32.gmra.mxu0 %v949
        %v1013 = vpop.f32.mrf.mxu0
        %v1014 = vadd.f32 0.0, %v1013
        %1015 = vdwg.mxu0
        %v1016 = vadd.f32 %v953, %v974
        %v1017 = vxor.u32 %v1016, 2147483648
        %v1018 = vmul.f32 %v1017, 1.442695
        %v1019 = vpow.pop %v1018
        %v1020 = vadd.f32 %v1019, 1.0
        %v1021 = vrcp.pop %v1020
        %v1022 = vmul.f32 %v1020, %v1021
        %v1023 = vsub.f32 1.0, %v1022
        %v1024 = vmul.f32 %v1021, %v1023
        %v1025 = vadd.f32 %v1021, %v1024
        %vm1026 = vweird.f32 %v1020
        %vm1027 = vweird.f32 %v1021
        %vm1028 = vmor %vm1026, %vm1027
        %v1029 = vsel %vm1028, %v1021, %v1025
        %v1030 = vand.u32 2147483647, %v1020
        %vm1031 = vcmp.eq.f32.partialorder %v1030, 8.507059e+37
        %v1032 = vand.u32 %v1020, 2147483648
        %v1033 = vor.u32 1.1754944e-38, %v1032
        %v1034 = vsel %vm1031, %v1033, %v1029
        %v1035 = vmul.f32 1.0, %v1034
        %v1036 = vadd.f32 %v954, %v994
        %v1037 = vxor.u32 %v1036, 2147483648
        %v1038 = vmul.f32 %v1037, 1.442695
        %v1039 = vpow.pop %v1038
        %v1040 = vadd.f32 %v1039, 1.0
        %v1041 = vrcp.pop %v1040
        %v1042 = vmul.f32 %v1040, %v1041
        %v1043 = vsub.f32 1.0, %v1042
        %v1044 = vmul.f32 %v1041, %v1043
        %v1045 = vadd.f32 %v1041, %v1044
        %vm1046 = vweird.f32 %v1040
        %vm1047 = vweird.f32 %v1041
        %vm1048 = vmor %vm1046, %vm1047
        %v1049 = vsel %vm1048, %v1041, %v1045
        %v1050 = vand.u32 2147483647, %v1040
        %vm1051 = vcmp.eq.f32.partialorder %v1050, 8.507059e+37
        %v1052 = vand.u32 %v1040, 2147483648
        %v1053 = vor.u32 1.1754944e-38, %v1052
        %v1054 = vsel %vm1051, %v1053, %v1049
        %v1055 = vmul.f32 1.0, %v1054
        %v1056 = vadd.f32 %v1014, %v630
        %v1057 = vmul.f32 %v1035, %v1056
        %v1058 = vadd.f32 %v955, %v1057
        %v1059 = vtanh.pop %v1058
        %v1060 = vsub.f32 1.0, %v1055
        %v1061 = vmul.f32 %v1060, %v1059
        %v1062 = vmul.f32 %v1055, %v949
        %v1063 = vadd.f32 %v1061, %v1062
        %v1064 = vstv %s948
        %vm1065 = vcmp.lt.s32.totalorder %v1064, %v627
        %v1066 = vsel %vm1065, 1, 0
        %1067 = vset.pattern.permute.xlu0 0
        %1068 = vperm.xlu0 %1067, %v1066
        %v1069 = vpop.permute.xlu0 %1068
        %vm1070 = vcmp.eq.s32.totalorder %v1069, 1
        %v1071 = vsel %vm1070, %v1063, %v949
        %1072 = vst [vmem:[#allocation2] sm:$0xff] %v1071
        %v1073 = vsel %vm1070, %v1063, 0.0
        %s1074 = smul.u32 %s947, 8
        %s1075 = scalar_lea.vmem %s410, %s1074 [#allocation10]
        %1076 = vst [vmem:[%s1075] sm:$0xff] %v1073
        %s1077 = sadd.s32 %s30, 3
        %s1078 = sadd.s32 %s684, %s1077
        %v1079 = vld [vmem:[#allocation2] sm:$0xff]
        %s1080 = smul.u32 %s1077, 3
        %s1081 = smul.addr %s1080, 8
        %s1082 = scalar_lea.vmem [#allocation3], %s1081
        %v1083 = vld [vmem:[%s1082] sm:$0xff]
        %v1084 = vld [vmem:[%s1082 + $0x8] sm:$0xff]
        %v1085 = vld [vmem:[%s1082 + $0x10] sm:$0xff]
        %1086 = vmatpush.msra.mxu0 %v677
        %1087 = vmatpush.msra.mxu0 %v674
        %1088 = vmatpush.msra.mxu0 %v671
        %1089 = vmatpush.msra.mxu0 %v668
        %1090 = vmatpush.msra.mxu0 %v665
        %1091 = vmatpush.msra.mxu0 %v662
        %1092 = vmatpush.msra.mxu0 %v659
        %1093 = vmatpush.msra.mxu0 %v656
        %1094 = vmatpush.msra.mxu0 %v653
        %1095 = vmatpush.msra.mxu0 %v650
        %1096 = vmatpush.msra.mxu0 %v647
        %1097 = vmatpush.msra.mxu0 %v644
        %1098 = vmatpush.msra.mxu0 %v641
        %1099 = vmatpush.msra.mxu0 %v638
        %1100 = vmatpush.msra.mxu0 %v635
        %1101 = vmatpush.msra.mxu0 %v632
        %1102 = vmatmul.f32.gmra.mxu0 %v1079
        %v1103 = vpop.f32.mrf.mxu0
        %v1104 = vadd.f32 0.0, %v1103
        %1105 = vdwg.mxu0
        %1106 = vmatpush.msra.mxu0 %v678
        %1107 = vmatpush.msra.mxu0 %v675
        %1108 = vmatpush.msra.mxu0 %v672
        %1109 = vmatpush.msra.mxu0 %v669
        %1110 = vmatpush.msra.mxu0 %v666
        %1111 = vmatpush.msra.mxu0 %v663
        %1112 = vmatpush.msra.mxu0 %v660
        %1113 = vmatpush.msra.mxu0 %v657
        %1114 = vmatpush.msra.mxu0 %v654
        %1115 = vmatpush.msra.mxu0 %v651
        %1116 = vmatpush.msra.mxu0 %v648
        %1117 = vmatpush.msra.mxu0 %v645
        %1118 = vmatpush.msra.mxu0 %v642
        %1119 = vmatpush.msra.mxu0 %v639
        %1120 = vmatpush.msra.mxu0 %v636
        %1121 = vmatpush.msra.mxu0 %v633
        %1122 = vmatmul.f32.gmra.mxu0 %v1079
        %v1123 = vpop.f32.mrf.mxu0
        %v1124 = vadd.f32 0.0, %v1123
        %1125 = vdwg.mxu0
        %1126 = vmatpush.msra.mxu0 %v679
        %1127 = vmatpush.msra.mxu0 %v676
        %1128 = vmatpush.msra.mxu0 %v673
        %1129 = vmatpush.msra.mxu0 %v670
        %1130 = vmatpush.msra.mxu0 %v667
        %1131 = vmatpush.msra.mxu0 %v664
        %1132 = vmatpush.msra.mxu0 %v661
        %1133 = vmatpush.msra.mxu0 %v658
        %1134 = vmatpush.msra.mxu0 %v655
        %1135 = vmatpush.msra.mxu0 %v652
        %1136 = vmatpush.msra.mxu0 %v649
        %1137 = vmatpush.msra.mxu0 %v646
        %1138 = vmatpush.msra.mxu0 %v643
        %1139 = vmatpush.msra.mxu0 %v640
        %1140 = vmatpush.msra.mxu0 %v637
        %1141 = vmatpush.msra.mxu0 %v634
        %1142 = vmatmul.f32.gmra.mxu0 %v1079
        %v1143 = vpop.f32.mrf.mxu0
        %v1144 = vadd.f32 0.0, %v1143
        %1145 = vdwg.mxu0
        %v1146 = vadd.f32 %v1083, %v1104
        %v1147 = vxor.u32 %v1146, 2147483648
        %v1148 = vmul.f32 %v1147, 1.442695
        %v1149 = vpow.pop %v1148
        %v1150 = vadd.f32 %v1149, 1.0
        %v1151 = vrcp.pop %v1150
        %v1152 = vmul.f32 %v1150, %v1151
        %v1153 = vsub.f32 1.0, %v1152
        %v1154 = vmul.f32 %v1151, %v1153
        %v1155 = vadd.f32 %v1151, %v1154
        %vm1156 = vweird.f32 %v1150
        %vm1157 = vweird.f32 %v1151
        %vm1158 = vmor %vm1156, %vm1157
        %v1159 = vsel %vm1158, %v1151, %v1155
        %v1160 = vand.u32 2147483647, %v1150
        %vm1161 = vcmp.eq.f32.partialorder %v1160, 8.507059e+37
        %v1162 = vand.u32 %v1150, 2147483648
        %v1163 = vor.u32 1.1754944e-38, %v1162
        %v1164 = vsel %vm1161, %v1163, %v1159
        %v1165 = vmul.f32 1.0, %v1164
        %v1166 = vadd.f32 %v1084, %v1124
        %v1167 = vxor.u32 %v1166, 2147483648
        %v1168 = vmul.f32 %v1167, 1.442695
        %v1169 = vpow.pop %v1168
        %v1170 = vadd.f32 %v1169, 1.0
        %v1171 = vrcp.pop %v1170
        %v1172 = vmul.f32 %v1170, %v1171
        %v1173 = vsub.f32 1.0, %v1172
        %v1174 = vmul.f32 %v1171, %v1173
        %v1175 = vadd.f32 %v1171, %v1174
        %vm1176 = vweird.f32 %v1170
        %vm1177 = vweird.f32 %v1171
        %vm1178 = vmor %vm1176, %vm1177
        %v1179 = vsel %vm1178, %v1171, %v1175
        %v1180 = vand.u32 2147483647, %v1170
        %vm1181 = vcmp.eq.f32.partialorder %v1180, 8.507059e+37
        %v1182 = vand.u32 %v1170, 2147483648
        %v1183 = vor.u32 1.1754944e-38, %v1182
        %v1184 = vsel %vm1181, %v1183, %v1179
        %v1185 = vmul.f32 1.0, %v1184
        %v1186 = vadd.f32 %v1144, %v630
        %v1187 = vmul.f32 %v1165, %v1186
        %v1188 = vadd.f32 %v1085, %v1187
        %v1189 = vtanh.pop %v1188
        %v1190 = vsub.f32 1.0, %v1185
        %v1191 = vmul.f32 %v1190, %v1189
        %v1192 = vmul.f32 %v1185, %v1079
        %v1193 = vadd.f32 %v1191, %v1192
        %v1194 = vstv %s1078
        %vm1195 = vcmp.lt.s32.totalorder %v1194, %v627
        %v1196 = vsel %vm1195, 1, 0
        %1197 = vset.pattern.permute.xlu0 0
        %1198 = vperm.xlu0 %1197, %v1196
        %v1199 = vpop.permute.xlu0 %1198
        %vm1200 = vcmp.eq.s32.totalorder %v1199, 1
        %v1201 = vsel %vm1200, %v1193, %v1079
        %1202 = vst [vmem:[#allocation2] sm:$0xff] %v1201
        %v1203 = vsel %vm1200, %v1193, 0.0
        %s1204 = smul.u32 %s1077, 8
        %s1205 = scalar_lea.vmem %s410, %s1204 [#allocation10]
        %1206 = vst [vmem:[%s1205] sm:$0xff] %v1203
        %s1207 = ssub.s32 4, %s30
        %s1208 = sadd.s32 %s684, %s1207
        %v1209 = vld [vmem:[#allocation2] sm:$0xff]
        %s1210 = smul.u32 %s1207, 3
        %s1211 = smul.addr %s1210, 8
        %s1212 = scalar_lea.vmem [#allocation3], %s1211
        %v1213 = vld [vmem:[%s1212] sm:$0xff]
        %v1214 = vld [vmem:[%s1212 + $0x8] sm:$0xff]
        %v1215 = vld [vmem:[%s1212 + $0x10] sm:$0xff]
        %1216 = vmatpush.msra.mxu0 %v677
        %1217 = vmatpush.msra.mxu0 %v674
        %1218 = vmatpush.msra.mxu0 %v671
        %1219 = vmatpush.msra.mxu0 %v668
        %1220 = vmatpush.msra.mxu0 %v665
        %1221 = vmatpush.msra.mxu0 %v662
        %1222 = vmatpush.msra.mxu0 %v659
        %1223 = vmatpush.msra.mxu0 %v656
        %1224 = vmatpush.msra.mxu0 %v653
        %1225 = vmatpush.msra.mxu0 %v650
        %1226 = vmatpush.msra.mxu0 %v647
        %1227 = vmatpush.msra.mxu0 %v644
        %1228 = vmatpush.msra.mxu0 %v641
        %1229 = vmatpush.msra.mxu0 %v638
        %1230 = vmatpush.msra.mxu0 %v635
        %1231 = vmatpush.msra.mxu0 %v632
        %1232 = vmatmul.f32.gmra.mxu0 %v1209
        %v1233 = vpop.f32.mrf.mxu0
        %v1234 = vadd.f32 0.0, %v1233
        %1235 = vdwg.mxu0
        %1236 = vmatpush.msra.mxu0 %v678
        %1237 = vmatpush.msra.mxu0 %v675
        %1238 = vmatpush.msra.mxu0 %v672
        %1239 = vmatpush.msra.mxu0 %v669
        %1240 = vmatpush.msra.mxu0 %v666
        %1241 = vmatpush.msra.mxu0 %v663
        %1242 = vmatpush.msra.mxu0 %v660
        %1243 = vmatpush.msra.mxu0 %v657
        %1244 = vmatpush.msra.mxu0 %v654
        %1245 = vmatpush.msra.mxu0 %v651
        %1246 = vmatpush.msra.mxu0 %v648
        %1247 = vmatpush.msra.mxu0 %v645
        %1248 = vmatpush.msra.mxu0 %v642
        %1249 = vmatpush.msra.mxu0 %v639
        %1250 = vmatpush.msra.mxu0 %v636
        %1251 = vmatpush.msra.mxu0 %v633
        %1252 = vmatmul.f32.gmra.mxu0 %v1209
        %v1253 = vpop.f32.mrf.mxu0
        %v1254 = vadd.f32 0.0, %v1253
        %1255 = vdwg.mxu0
        %1256 = vmatpush.msra.mxu0 %v679
        %1257 = vmatpush.msra.mxu0 %v676
        %1258 = vmatpush.msra.mxu0 %v673
        %1259 = vmatpush.msra.mxu0 %v670
        %1260 = vmatpush.msra.mxu0 %v667
        %1261 = vmatpush.msra.mxu0 %v664
        %1262 = vmatpush.msra.mxu0 %v661
        %1263 = vmatpush.msra.mxu0 %v658
        %1264 = vmatpush.msra.mxu0 %v655
        %1265 = vmatpush.msra.mxu0 %v652
        %1266 = vmatpush.msra.mxu0 %v649
        %1267 = vmatpush.msra.mxu0 %v646
        %1268 = vmatpush.msra.mxu0 %v643
        %1269 = vmatpush.msra.mxu0 %v640
        %1270 = vmatpush.msra.mxu0 %v637
        %1271 = vmatpush.msra.mxu0 %v634
        %1272 = vmatmul.f32.gmra.mxu0 %v1209
        %v1273 = vpop.f32.mrf.mxu0
        %v1274 = vadd.f32 0.0, %v1273
        %1275 = vdwg.mxu0
        %v1276 = vadd.f32 %v1213, %v1234
        %v1277 = vxor.u32 %v1276, 2147483648
        %v1278 = vmul.f32 %v1277, 1.442695
        %v1279 = vpow.pop %v1278
        %v1280 = vadd.f32 %v1279, 1.0
        %v1281 = vrcp.pop %v1280
        %v1282 = vmul.f32 %v1280, %v1281
        %v1283 = vsub.f32 1.0, %v1282
        %v1284 = vmul.f32 %v1281, %v1283
        %v1285 = vadd.f32 %v1281, %v1284
        %vm1286 = vweird.f32 %v1280
        %vm1287 = vweird.f32 %v1281
        %vm1288 = vmor %vm1286, %vm1287
        %v1289 = vsel %vm1288, %v1281, %v1285
        %v1290 = vand.u32 2147483647, %v1280
        %vm1291 = vcmp.eq.f32.partialorder %v1290, 8.507059e+37
        %v1292 = vand.u32 %v1280, 2147483648
        %v1293 = vor.u32 1.1754944e-38, %v1292
        %v1294 = vsel %vm1291, %v1293, %v1289
        %v1295 = vmul.f32 1.0, %v1294
        %v1296 = vadd.f32 %v1214, %v1254
        %v1297 = vxor.u32 %v1296, 2147483648
        %v1298 = vmul.f32 %v1297, 1.442695
        %v1299 = vpow.pop %v1298
        %v1300 = vadd.f32 %v1299, 1.0
        %v1301 = vrcp.pop %v1300
        %v1302 = vmul.f32 %v1300, %v1301
        %v1303 = vsub.f32 1.0, %v1302
        %v1304 = vmul.f32 %v1301, %v1303
        %v1305 = vadd.f32 %v1301, %v1304
        %vm1306 = vweird.f32 %v1300
        %vm1307 = vweird.f32 %v1301
        %vm1308 = vmor %vm1306, %vm1307
        %v1309 = vsel %vm1308, %v1301, %v1305
        %v1310 = vand.u32 2147483647, %v1300
        %vm1311 = vcmp.eq.f32.partialorder %v1310, 8.507059e+37
        %v1312 = vand.u32 %v1300, 2147483648
        %v1313 = vor.u32 1.1754944e-38, %v1312
        %v1314 = vsel %vm1311, %v1313, %v1309
        %v1315 = vmul.f32 1.0, %v1314
        %v1316 = vadd.f32 %v1274, %v630
        %v1317 = vmul.f32 %v1295, %v1316
        %v1318 = vadd.f32 %v1215, %v1317
        %v1319 = vtanh.pop %v1318
        %v1320 = vsub.f32 1.0, %v1315
        %v1321 = vmul.f32 %v1320, %v1319
        %v1322 = vmul.f32 %v1315, %v1209
        %v1323 = vadd.f32 %v1321, %v1322
        %v1324 = vstv %s1208
        %vm1325 = vcmp.lt.s32.totalorder %v1324, %v627
        %v1326 = vsel %vm1325, 1, 0
        %1327 = vset.pattern.permute.xlu0 0
        %1328 = vperm.xlu0 %1327, %v1326
        %v1329 = vpop.permute.xlu0 %1328
        %vm1330 = vcmp.eq.s32.totalorder %v1329, 1
        %v1331 = vsel %vm1330, %v1323, %v1209
        %1332 = vst [vmem:[#allocation2] sm:$0xff] %v1331
        %v1333 = vsel %vm1330, %v1323, 0.0
        %s1334 = smul.u32 %s1207, 8
        %s1335 = scalar_lea.vmem %s410, %s1334 [#allocation10]
        %1336 = vst [vmem:[%s1335] sm:$0xff] %v1333
        %s1337 = smul.u32 %s30, 4294967293
        %s1338 = sadd.s32 %s1337, 5
        %s1339 = sadd.s32 %s684, %s1338
        %v1340 = vld [vmem:[#allocation2] sm:$0xff]
        %s1341 = smul.u32 %s1338, 3
        %s1342 = smul.addr %s1341, 8
        %s1343 = scalar_lea.vmem [#allocation3], %s1342
        %v1344 = vld [vmem:[%s1343] sm:$0xff]
        %v1345 = vld [vmem:[%s1343 + $0x8] sm:$0xff]
        %v1346 = vld [vmem:[%s1343 + $0x10] sm:$0xff]
        %1347 = vmatpush.msra.mxu0 %v677
        %1348 = vmatpush.msra.mxu0 %v674
        %1349 = vmatpush.msra.mxu0 %v671
        %1350 = vmatpush.msra.mxu0 %v668
        %1351 = vmatpush.msra.mxu0 %v665
        %1352 = vmatpush.msra.mxu0 %v662
        %1353 = vmatpush.msra.mxu0 %v659
        %1354 = vmatpush.msra.mxu0 %v656
        %1355 = vmatpush.msra.mxu0 %v653
        %1356 = vmatpush.msra.mxu0 %v650
        %1357 = vmatpush.msra.mxu0 %v647
        %1358 = vmatpush.msra.mxu0 %v644
        %1359 = vmatpush.msra.mxu0 %v641
        %1360 = vmatpush.msra.mxu0 %v638
        %1361 = vmatpush.msra.mxu0 %v635
        %1362 = vmatpush.msra.mxu0 %v632
        %1363 = vmatmul.f32.gmra.mxu0 %v1340
        %v1364 = vpop.f32.mrf.mxu0
        %v1365 = vadd.f32 0.0, %v1364
        %1366 = vdwg.mxu0
        %1367 = vmatpush.msra.mxu0 %v678
        %1368 = vmatpush.msra.mxu0 %v675
        %1369 = vmatpush.msra.mxu0 %v672
        %1370 = vmatpush.msra.mxu0 %v669
        %1371 = vmatpush.msra.mxu0 %v666
        %1372 = vmatpush.msra.mxu0 %v663
        %1373 = vmatpush.msra.mxu0 %v660
        %1374 = vmatpush.msra.mxu0 %v657
        %1375 = vmatpush.msra.mxu0 %v654
        %1376 = vmatpush.msra.mxu0 %v651
        %1377 = vmatpush.msra.mxu0 %v648
        %1378 = vmatpush.msra.mxu0 %v645
        %1379 = vmatpush.msra.mxu0 %v642
        %1380 = vmatpush.msra.mxu0 %v639
        %1381 = vmatpush.msra.mxu0 %v636
        %1382 = vmatpush.msra.mxu0 %v633
        %1383 = vmatmul.f32.gmra.mxu0 %v1340
        %v1384 = vpop.f32.mrf.mxu0
        %v1385 = vadd.f32 0.0, %v1384
        %1386 = vdwg.mxu0
        %1387 = vmatpush.msra.mxu0 %v679
        %1388 = vmatpush.msra.mxu0 %v676
        %1389 = vmatpush.msra.mxu0 %v673
        %1390 = vmatpush.msra.mxu0 %v670
        %1391 = vmatpush.msra.mxu0 %v667
        %1392 = vmatpush.msra.mxu0 %v664
        %1393 = vmatpush.msra.mxu0 %v661
        %1394 = vmatpush.msra.mxu0 %v658
        %1395 = vmatpush.msra.mxu0 %v655
        %1396 = vmatpush.msra.mxu0 %v652
        %1397 = vmatpush.msra.mxu0 %v649
        %1398 = vmatpush.msra.mxu0 %v646
        %1399 = vmatpush.msra.mxu0 %v643
        %1400 = vmatpush.msra.mxu0 %v640
        %1401 = vmatpush.msra.mxu0 %v637
        %1402 = vmatpush.msra.mxu0 %v634
        %1403 = vmatmul.f32.gmra.mxu0 %v1340
        %v1404 = vpop.f32.mrf.mxu0
        %v1405 = vadd.f32 0.0, %v1404
        %1406 = vdwg.mxu0
        %v1407 = vadd.f32 %v1344, %v1365
        %v1408 = vxor.u32 %v1407, 2147483648
        %v1409 = vmul.f32 %v1408, 1.442695
        %v1410 = vpow.pop %v1409
        %v1411 = vadd.f32 %v1410, 1.0
        %v1412 = vrcp.pop %v1411
        %v1413 = vmul.f32 %v1411, %v1412
        %v1414 = vsub.f32 1.0, %v1413
        %v1415 = vmul.f32 %v1412, %v1414
        %v1416 = vadd.f32 %v1412, %v1415
        %vm1417 = vweird.f32 %v1411
        %vm1418 = vweird.f32 %v1412
        %vm1419 = vmor %vm1417, %vm1418
        %v1420 = vsel %vm1419, %v1412, %v1416
        %v1421 = vand.u32 2147483647, %v1411
        %vm1422 = vcmp.eq.f32.partialorder %v1421, 8.507059e+37
        %v1423 = vand.u32 %v1411, 2147483648
        %v1424 = vor.u32 1.1754944e-38, %v1423
        %v1425 = vsel %vm1422, %v1424, %v1420
        %v1426 = vmul.f32 1.0, %v1425
        %v1427 = vadd.f32 %v1345, %v1385
        %v1428 = vxor.u32 %v1427, 2147483648
        %v1429 = vmul.f32 %v1428, 1.442695
        %v1430 = vpow.pop %v1429
        %v1431 = vadd.f32 %v1430, 1.0
        %v1432 = vrcp.pop %v1431
        %v1433 = vmul.f32 %v1431, %v1432
        %v1434 = vsub.f32 1.0, %v1433
        %v1435 = vmul.f32 %v1432, %v1434
        %v1436 = vadd.f32 %v1432, %v1435
        %vm1437 = vweird.f32 %v1431
        %vm1438 = vweird.f32 %v1432
        %vm1439 = vmor %vm1437, %vm1438
        %v1440 = vsel %vm1439, %v1432, %v1436
        %v1441 = vand.u32 2147483647, %v1431
        %vm1442 = vcmp.eq.f32.partialorder %v1441, 8.507059e+37
        %v1443 = vand.u32 %v1431, 2147483648
        %v1444 = vor.u32 1.1754944e-38, %v1443
        %v1445 = vsel %vm1442, %v1444, %v1440
        %v1446 = vmul.f32 1.0, %v1445
        %v1447 = vadd.f32 %v1405, %v630
        %v1448 = vmul.f32 %v1426, %v1447
        %v1449 = vadd.f32 %v1346, %v1448
        %v1450 = vtanh.pop %v1449
        %v1451 = vsub.f32 1.0, %v1446
        %v1452 = vmul.f32 %v1451, %v1450
        %v1453 = vmul.f32 %v1446, %v1340
        %v1454 = vadd.f32 %v1452, %v1453
        %v1455 = vstv %s1339
        %vm1456 = vcmp.lt.s32.totalorder %v1455, %v627
        %v1457 = vsel %vm1456, 1, 0
        %1458 = vset.pattern.permute.xlu0 0
        %1459 = vperm.xlu0 %1458, %v1457
        %v1460 = vpop.permute.xlu0 %1459
        %vm1461 = vcmp.eq.s32.totalorder %v1460, 1
        %v1462 = vsel %vm1461, %v1454, %v1340
        %1463 = vst [vmem:[#allocation2] sm:$0xff] %v1462
        %v1464 = vsel %vm1461, %v1454, 0.0
        %s1465 = smul.u32 %s1338, 8
        %s1466 = scalar_lea.vmem %s410, %s1465 [#allocation10]
        %1467 = vst [vmem:[%s1466] sm:$0xff] %v1464
        %s1468 = smul.u32 %s30, 4294967291
        %s1469 = sadd.s32 %s1468, 6
        %s1470 = sadd.s32 %s684, %s1469
        %v1471 = vld [vmem:[#allocation2] sm:$0xff]
        %s1472 = smul.u32 %s1469, 3
        %s1473 = smul.addr %s1472, 8
        %s1474 = scalar_lea.vmem [#allocation3], %s1473
        %v1475 = vld [vmem:[%s1474] sm:$0xff]
        %v1476 = vld [vmem:[%s1474 + $0x8] sm:$0xff]
        %v1477 = vld [vmem:[%s1474 + $0x10] sm:$0xff]
        %1478 = vmatpush.msra.mxu0 %v677
        %1479 = vmatpush.msra.mxu0 %v674
        %1480 = vmatpush.msra.mxu0 %v671
        %1481 = vmatpush.msra.mxu0 %v668
        %1482 = vmatpush.msra.mxu0 %v665
        %1483 = vmatpush.msra.mxu0 %v662
        %1484 = vmatpush.msra.mxu0 %v659
        %1485 = vmatpush.msra.mxu0 %v656
        %1486 = vmatpush.msra.mxu0 %v653
        %1487 = vmatpush.msra.mxu0 %v650
        %1488 = vmatpush.msra.mxu0 %v647
        %1489 = vmatpush.msra.mxu0 %v644
        %1490 = vmatpush.msra.mxu0 %v641
        %1491 = vmatpush.msra.mxu0 %v638
        %1492 = vmatpush.msra.mxu0 %v635
        %1493 = vmatpush.msra.mxu0 %v632
        %1494 = vmatmul.f32.gmra.mxu0 %v1471
        %v1495 = vpop.f32.mrf.mxu0
        %v1496 = vadd.f32 0.0, %v1495
        %1497 = vdwg.mxu0
        %1498 = vmatpush.msra.mxu0 %v678
        %1499 = vmatpush.msra.mxu0 %v675
        %1500 = vmatpush.msra.mxu0 %v672
        %1501 = vmatpush.msra.mxu0 %v669
        %1502 = vmatpush.msra.mxu0 %v666
        %1503 = vmatpush.msra.mxu0 %v663
        %1504 = vmatpush.msra.mxu0 %v660
        %1505 = vmatpush.msra.mxu0 %v657
        %1506 = vmatpush.msra.mxu0 %v654
        %1507 = vmatpush.msra.mxu0 %v651
        %1508 = vmatpush.msra.mxu0 %v648
        %1509 = vmatpush.msra.mxu0 %v645
        %1510 = vmatpush.msra.mxu0 %v642
        %1511 = vmatpush.msra.mxu0 %v639
        %1512 = vmatpush.msra.mxu0 %v636
        %1513 = vmatpush.msra.mxu0 %v633
        %1514 = vmatmul.f32.gmra.mxu0 %v1471
        %v1515 = vpop.f32.mrf.mxu0
        %v1516 = vadd.f32 0.0, %v1515
        %1517 = vdwg.mxu0
        %1518 = vmatpush.msra.mxu0 %v679
        %1519 = vmatpush.msra.mxu0 %v676
        %1520 = vmatpush.msra.mxu0 %v673
        %1521 = vmatpush.msra.mxu0 %v670
        %1522 = vmatpush.msra.mxu0 %v667
        %1523 = vmatpush.msra.mxu0 %v664
        %1524 = vmatpush.msra.mxu0 %v661
        %1525 = vmatpush.msra.mxu0 %v658
        %1526 = vmatpush.msra.mxu0 %v655
        %1527 = vmatpush.msra.mxu0 %v652
        %1528 = vmatpush.msra.mxu0 %v649
        %1529 = vmatpush.msra.mxu0 %v646
        %1530 = vmatpush.msra.mxu0 %v643
        %1531 = vmatpush.msra.mxu0 %v640
        %1532 = vmatpush.msra.mxu0 %v637
        %1533 = vmatpush.msra.mxu0 %v634
        %1534 = vmatmul.f32.gmra.mxu0 %v1471
        %v1535 = vpop.f32.mrf.mxu0
        %v1536 = vadd.f32 0.0, %v1535
        %1537 = vdwg.mxu0
        %v1538 = vadd.f32 %v1475, %v1496
        %v1539 = vxor.u32 %v1538, 2147483648
        %v1540 = vmul.f32 %v1539, 1.442695
        %v1541 = vpow.pop %v1540
        %v1542 = vadd.f32 %v1541, 1.0
        %v1543 = vrcp.pop %v1542
        %v1544 = vmul.f32 %v1542, %v1543
        %v1545 = vsub.f32 1.0, %v1544
        %v1546 = vmul.f32 %v1543, %v1545
        %v1547 = vadd.f32 %v1543, %v1546
        %vm1548 = vweird.f32 %v1542
        %vm1549 = vweird.f32 %v1543
        %vm1550 = vmor %vm1548, %vm1549
        %v1551 = vsel %vm1550, %v1543, %v1547
        %v1552 = vand.u32 2147483647, %v1542
        %vm1553 = vcmp.eq.f32.partialorder %v1552, 8.507059e+37
        %v1554 = vand.u32 %v1542, 2147483648
        %v1555 = vor.u32 1.1754944e-38, %v1554
        %v1556 = vsel %vm1553, %v1555, %v1551
        %v1557 = vmul.f32 1.0, %v1556
        %v1558 = vadd.f32 %v1476, %v1516
        %v1559 = vxor.u32 %v1558, 2147483648
        %v1560 = vmul.f32 %v1559, 1.442695
        %v1561 = vpow.pop %v1560
        %v1562 = vadd.f32 %v1561, 1.0
        %v1563 = vrcp.pop %v1562
        %v1564 = vmul.f32 %v1562, %v1563
        %v1565 = vsub.f32 1.0, %v1564
        %v1566 = vmul.f32 %v1563, %v1565
        %v1567 = vadd.f32 %v1563, %v1566
        %vm1568 = vweird.f32 %v1562
        %vm1569 = vweird.f32 %v1563
        %vm1570 = vmor %vm1568, %vm1569
        %v1571 = vsel %vm1570, %v1563, %v1567
        %v1572 = vand.u32 2147483647, %v1562
        %vm1573 = vcmp.eq.f32.partialorder %v1572, 8.507059e+37
        %v1574 = vand.u32 %v1562, 2147483648
        %v1575 = vor.u32 1.1754944e-38, %v1574
        %v1576 = vsel %vm1573, %v1575, %v1571
        %v1577 = vmul.f32 1.0, %v1576
        %v1578 = vadd.f32 %v1536, %v630
        %v1579 = vmul.f32 %v1557, %v1578
        %v1580 = vadd.f32 %v1477, %v1579
        %v1581 = vtanh.pop %v1580
        %v1582 = vsub.f32 1.0, %v1577
        %v1583 = vmul.f32 %v1582, %v1581
        %v1584 = vmul.f32 %v1577, %v1471
        %v1585 = vadd.f32 %v1583, %v1584
        %v1586 = vstv %s1470
        %vm1587 = vcmp.lt.s32.totalorder %v1586, %v627
        %v1588 = vsel %vm1587, 1, 0
        %1589 = vset.pattern.permute.xlu0 0
        %1590 = vperm.xlu0 %1589, %v1588
        %v1591 = vpop.permute.xlu0 %1590
        %vm1592 = vcmp.eq.s32.totalorder %v1591, 1
        %v1593 = vsel %vm1592, %v1585, %v1471
        %1594 = vst [vmem:[#allocation2] sm:$0xff] %v1593
        %v1595 = vsel %vm1592, %v1585, 0.0
        %s1596 = smul.u32 %s1469, 8
        %s1597 = scalar_lea.vmem %s410, %s1596 [#allocation10]
        %1598 = vst [vmem:[%s1597] sm:$0xff] %v1595
        %s1599 = smul.u32 %s30, 4294967289
        %s1600 = sadd.s32 %s1599, 7
        %s1601 = sadd.s32 %s684, %s1600
        %v1602 = vld [vmem:[#allocation2] sm:$0xff]
        %s1603 = smul.u32 %s1600, 3
        %s1604 = smul.addr %s1603, 8
        %s1605 = scalar_lea.vmem [#allocation3], %s1604
        %v1606 = vld [vmem:[%s1605] sm:$0xff]
        %v1607 = vld [vmem:[%s1605 + $0x8] sm:$0xff]
        %v1608 = vld [vmem:[%s1605 + $0x10] sm:$0xff]
        %1609 = vmatpush.msra.mxu0 %v677
        %1610 = vmatpush.msra.mxu0 %v674
        %1611 = vmatpush.msra.mxu0 %v671
        %1612 = vmatpush.msra.mxu0 %v668
        %1613 = vmatpush.msra.mxu0 %v665
        %1614 = vmatpush.msra.mxu0 %v662
        %1615 = vmatpush.msra.mxu0 %v659
        %1616 = vmatpush.msra.mxu0 %v656
        %1617 = vmatpush.msra.mxu0 %v653
        %1618 = vmatpush.msra.mxu0 %v650
        %1619 = vmatpush.msra.mxu0 %v647
        %1620 = vmatpush.msra.mxu0 %v644
        %1621 = vmatpush.msra.mxu0 %v641
        %1622 = vmatpush.msra.mxu0 %v638
        %1623 = vmatpush.msra.mxu0 %v635
        %1624 = vmatpush.msra.mxu0 %v632
        %1625 = vmatmul.f32.gmra.mxu0 %v1602
        %v1626 = vpop.f32.mrf.mxu0
        %v1627 = vadd.f32 0.0, %v1626
        %1628 = vdwg.mxu0
        %1629 = vmatpush.msra.mxu0 %v678
        %1630 = vmatpush.msra.mxu0 %v675
        %1631 = vmatpush.msra.mxu0 %v672
        %1632 = vmatpush.msra.mxu0 %v669
        %1633 = vmatpush.msra.mxu0 %v666
        %1634 = vmatpush.msra.mxu0 %v663
        %1635 = vmatpush.msra.mxu0 %v660
        %1636 = vmatpush.msra.mxu0 %v657
        %1637 = vmatpush.msra.mxu0 %v654
        %1638 = vmatpush.msra.mxu0 %v651
        %1639 = vmatpush.msra.mxu0 %v648
        %1640 = vmatpush.msra.mxu0 %v645
        %1641 = vmatpush.msra.mxu0 %v642
        %1642 = vmatpush.msra.mxu0 %v639
        %1643 = vmatpush.msra.mxu0 %v636
        %1644 = vmatpush.msra.mxu0 %v633
        %1645 = vmatmul.f32.gmra.mxu0 %v1602
        %v1646 = vpop.f32.mrf.mxu0
        %v1647 = vadd.f32 0.0, %v1646
        %1648 = vdwg.mxu0
        %1649 = vmatpush.msra.mxu0 %v679
        %1650 = vmatpush.msra.mxu0 %v676
        %1651 = vmatpush.msra.mxu0 %v673
        %1652 = vmatpush.msra.mxu0 %v670
        %1653 = vmatpush.msra.mxu0 %v667
        %1654 = vmatpush.msra.mxu0 %v664
        %1655 = vmatpush.msra.mxu0 %v661
        %1656 = vmatpush.msra.mxu0 %v658
        %1657 = vmatpush.msra.mxu0 %v655
        %1658 = vmatpush.msra.mxu0 %v652
        %1659 = vmatpush.msra.mxu0 %v649
        %1660 = vmatpush.msra.mxu0 %v646
        %1661 = vmatpush.msra.mxu0 %v643
        %1662 = vmatpush.msra.mxu0 %v640
        %1663 = vmatpush.msra.mxu0 %v637
        %1664 = vmatpush.msra.mxu0 %v634
        %1665 = vmatmul.f32.gmra.mxu0 %v1602
        %v1666 = vpop.f32.mrf.mxu0
        %v1667 = vadd.f32 0.0, %v1666
        %1668 = vdwg.mxu0
        %v1669 = vadd.f32 %v1606, %v1627
        %v1670 = vxor.u32 %v1669, 2147483648
        %v1671 = vmul.f32 %v1670, 1.442695
        %v1672 = vpow.pop %v1671
        %v1673 = vadd.f32 %v1672, 1.0
        %v1674 = vrcp.pop %v1673
        %v1675 = vmul.f32 %v1673, %v1674
        %v1676 = vsub.f32 1.0, %v1675
        %v1677 = vmul.f32 %v1674, %v1676
        %v1678 = vadd.f32 %v1674, %v1677
        %vm1679 = vweird.f32 %v1673
        %vm1680 = vweird.f32 %v1674
        %vm1681 = vmor %vm1679, %vm1680
        %v1682 = vsel %vm1681, %v1674, %v1678
        %v1683 = vand.u32 2147483647, %v1673
        %vm1684 = vcmp.eq.f32.partialorder %v1683, 8.507059e+37
        %v1685 = vand.u32 %v1673, 2147483648
        %v1686 = vor.u32 1.1754944e-38, %v1685
        %v1687 = vsel %vm1684, %v1686, %v1682
        %v1688 = vmul.f32 1.0, %v1687
        %v1689 = vadd.f32 %v1607, %v1647
        %v1690 = vxor.u32 %v1689, 2147483648
        %v1691 = vmul.f32 %v1690, 1.442695
        %v1692 = vpow.pop %v1691
        %v1693 = vadd.f32 %v1692, 1.0
        %v1694 = vrcp.pop %v1693
        %v1695 = vmul.f32 %v1693, %v1694
        %v1696 = vsub.f32 1.0, %v1695
        %v1697 = vmul.f32 %v1694, %v1696
        %v1698 = vadd.f32 %v1694, %v1697
        %vm1699 = vweird.f32 %v1693
        %vm1700 = vweird.f32 %v1694
        %vm1701 = vmor %vm1699, %vm1700
        %v1702 = vsel %vm1701, %v1694, %v1698
        %v1703 = vand.u32 2147483647, %v1693
        %vm1704 = vcmp.eq.f32.partialorder %v1703, 8.507059e+37
        %v1705 = vand.u32 %v1693, 2147483648
        %v1706 = vor.u32 1.1754944e-38, %v1705
        %v1707 = vsel %vm1704, %v1706, %v1702
        %v1708 = vmul.f32 1.0, %v1707
        %v1709 = vadd.f32 %v1667, %v630
        %v1710 = vmul.f32 %v1688, %v1709
        %v1711 = vadd.f32 %v1608, %v1710
        %v1712 = vtanh.pop %v1711
        %v1713 = vsub.f32 1.0, %v1708
        %v1714 = vmul.f32 %v1713, %v1712
        %v1715 = vmul.f32 %v1708, %v1602
        %v1716 = vadd.f32 %v1714, %v1715
        %v1717 = vstv %s1601
        %vm1718 = vcmp.lt.s32.totalorder %v1717, %v627
        %v1719 = vsel %vm1718, 1, 0
        %1720 = vset.pattern.permute.xlu0 0
        %1721 = vperm.xlu0 %1720, %v1719
        %v1722 = vpop.permute.xlu0 %1721
        %vm1723 = vcmp.eq.s32.totalorder %v1722, 1
        %v1724 = vsel %vm1723, %v1716, %v1602
        %1725 = vst [vmem:[#allocation2] sm:$0xff] %v1724
        %v1726 = vsel %vm1723, %v1716, 0.0
        %s1727 = smul.u32 %s1600, 8
        %s1728 = scalar_lea.vmem %s410, %s1727 [#allocation10]
        %1729 = vst [vmem:[%s1728] sm:$0xff] %v1726
        %s1730 = sand.u32 %s215, 1
        %s1731 = scalar_lea.sflag [#allocation6], %s1730
        %s1732 = sand.u32 %s215, 1
        %s1733 = smul.addr %s1732, 64
        %s1734 = scalar_lea.vmem [#allocation10], %s1733
        // Predicated region
        $region61: #{tpu_custom_call.1} parent=43 // pred_check
          %p1735 = pneg %p225
        $region62: #{tpu_custom_call.1} parent=43 // pred_check_branch
          %1737 = sbr.rel (%p1735) target = $region64
        $region63: #{tpu_custom_call.1} parent=43 // pred_region
          %s1738 = smul.u32 %s31, 2
          %s1739 = ssub.s32 0, %s1738
          %s1740 = smul.u32 %s30, %s1739
          %s1741 = sadd.s32 %s31, %s1740
          %s1742 = smul.u32 8, %s1741
          %1744 = vsyncadd %s1731, 0
          %s1745 = smul.addr %s1742, 2
          %s1746 = sadd.s32 %s30, %s1745
          %s1747 = smul.addr %s1746, 8
          %s1748 = scalar_lea.hbm %s6, %s1747
          %s1749 = sshll.u32 %s1734, 4
          %s1750 = int_to_ptr.vmem [resolvable:$true] %s1749
          %s1751 = sshll.u32 %s1748, 4
          %s1752 = int_to_ptr.hbm [resolvable:$true] %s1751
          %1757 = dma.vmem_to_hbm [thread:$0]  %s1750, 1024, %s1752, %s1731, 128, 256, 8
        $region64: #{tpu_custom_call.1} parent=43 // pred_fallthru
          _
      $region44: #{tpu_custom_call.1} parent=5 // pred_fallthru
        _
      %p1758 = scmp.le.s32.totalorder 2, %s21
      // Predicated region
      $region65: #{tpu_custom_call.1} parent=5 // pred_check
        %p1759 = pneg %p1758
      $region66: #{tpu_custom_call.1} parent=5 // pred_check_branch
        %1761 = sbr.rel (%p1759) target = $region68
      $region67: #{tpu_custom_call.1} parent=5 // pred_region
        %s1762 = ssub.s32 %s21, 2
        // Predicated region
        $region69: #{tpu_custom_call.1} parent=67 // pred_check
          %p1763 = pneg %p231
        $region70: #{tpu_custom_call.1} parent=67 // pred_check_branch
          %1765 = sbr.rel (%p1763) target = $region72
        $region71: #{tpu_custom_call.1} parent=67 // pred_region
          %s1766 = sand.u32 %s216, 1
          %s1767 = scalar_lea.sflag [#allocation6], %s1766
          %s1768 = sand.u32 %s216, 1
          %s1769 = smul.addr %s1768, 64
          %s1770 = scalar_lea.vmem [#allocation10], %s1769
          %1772 = dma.done %s1767, 1024
        $region72: #{tpu_custom_call.1} parent=67 // pred_fallthru
          _
      $region68: #{tpu_custom_call.1} parent=5 // pred_fallthru
        _
    $region6: #{tpu_custom_call.1} parent=1 // loop_footer
      %s25 = sadd.s32 1, %s21
    $region7: #{tpu_custom_call.1} parent=1 // loop_footer_branch
      %20 = sbr.rel target = $region3
    $region8: #{tpu_custom_call.1} parent=1 // loop_exit
      _
    %1773 = vsyncpa [#allocation5], 1
    %s1774 = scalar_lea.sflag [#allocation5], 1
    %1775 = vsyncpa %s1774, 1
    %1776 = vsyncpa [#allocation8], 1
    %s1777 = scalar_lea.sflag [#allocation8], 1
    %1778 = vsyncpa %s1777, 1
    %1779 = vsyncpa [#allocation6], 1
    %s1780 = scalar_lea.sflag [#allocation6], 1
    %1781 = vsyncpa %s1780, 1

</llo_original>
